<compile_context>
chip_gen: v5e
topology: v5e:2x2
jax: 0.10.0
libtpu: 0.0.40
codegen_flags: <defaults>
</compile_context>

<pallas_src>
import math
from functools import partial

import jax
import jax.numpy as jnp
import numpy as np
from jax.experimental import pallas as pl
from jax.experimental.pallas import tpu as pltpu

COMPUTE_DTYPE = jnp.bfloat16      # MXU-native; f32 accumulation inside the kernels
_LN_EPS = 1e-5
_NEG_INF = -1e30

_MAX_BLOCK_ROWS = 512             # fused_linear row tile (multiple of 16 for bf16 packing)
_MAX_BLOCK_COLS = 1024            # fused_linear column tile (bounds resident weight slab)
_MAX_BLOCK_SEQ = 256              # attention q / kv sequence tile
_VMEM_LIMIT_BYTES = 48 * 1024 * 1024   # safe on v5e/v6e (128 MiB phys) and v7x (64 MiB)


# ----------------------------------------------------------------------------
# Fused linear kernel:  y = [ +residual ] act( LN?(x) @ W + b )
# ----------------------------------------------------------------------------
def _make_linear_kernel(apply_ln, activation, add_residual):
    def kernel(*refs):
        if add_residual:
            x_ref, w_ref, b_ref, r_ref, o_ref = refs
        else:
            x_ref, w_ref, b_ref, o_ref = refs

        x = x_ref[...]
        if apply_ln:
            xf = x.astype(jnp.float32)
            mu = jnp.mean(xf, axis=-1, keepdims=True)
            xc = xf - mu
            var = jnp.mean(xc * xc, axis=-1, keepdims=True)
            x = (xc * jax.lax.rsqrt(var + _LN_EPS)).astype(w_ref.dtype)
        else:
            x = x.astype(w_ref.dtype)

        # bf16 x bf16 on the MXU, f32 accumulation.
        y = jnp.dot(x, w_ref[...], preferred_element_type=jnp.float32)
        y = y + b_ref[...].astype(jnp.float32)

        if activation == "gelu":
            y = jax.nn.gelu(y)                      # tanh approximation (see TODO)
        if add_residual:
            y = y + r_ref[...].astype(jnp.float32)

        o_ref[...] = y.astype(o_ref.dtype)
    return kernel


def fused_linear(x, w, b, *, apply_ln=False, activation=None, residual=None,
                 out_dtype=None):
    """x: (..., c_in); w: (c_in, c_out) pre-transposed bf16; b: (c_out,) f32."""
    orig_shape = x.shape
    c_in, c_out = w.shape
    out_dtype = x.dtype if out_dtype is None else out_dtype

    # Lane-dense output: pad narrow projections to 128 columns (zero weight/bias),
    # slice outside the kernel.  (For production, do this once at weight-load time.)
    pad_out = (c_out < 128) and (residual is None)
    if pad_out:
        w = jnp.pad(w, ((0, 0), (0, 128 - c_out)))
        b = jnp.pad(b, (0, 128 - c_out))
    n_cols = w.shape[1]

    x2 = x.reshape(-1, c_in)
    n = x2.shape[0]

    block_rows = n if n <= _MAX_BLOCK_ROWS else _MAX_BLOCK_ROWS
    # Keep the resident weight slab bounded (v7x 64 MiB VMEM): shrink the column
    # tile for very wide contractions (e.g. MLP2 with c_in >= 2048).
    max_cols = 512 if c_in >= 2048 else _MAX_BLOCK_COLS
    block_cols = n_cols if n_cols <= max_cols else max_cols
    nr = pl.cdiv(n, block_rows)
    nc = pl.cdiv(n_cols, block_cols)
    # Megacore: avoid a single-step grid when the layer is big enough to split.
    if nr == 1 and nc == 1 and n_cols >= 256 and n_cols % 256 == 0:
        block_cols = n_cols // 2
        nc = 2

    in_specs = [
        pl.BlockSpec((block_rows, c_in), lambda c, r: (r, 0)),
        pl.BlockSpec((c_in, block_cols), lambda c, r: (0, c)),   # invariant over rows
        pl.BlockSpec((1, block_cols), lambda c, r: (0, c)),
    ]
    args = [x2, w, b.reshape(1, n_cols)]
    if residual is not None:
        in_specs.append(pl.BlockSpec((block_rows, block_cols), lambda c, r: (r, c)))
        args.append(residual.reshape(-1, c_out))

    kernel = _make_linear_kernel(apply_ln, activation, residual is not None)
    out = pl.pallas_call(
        kernel,
        out_shape=jax.ShapeDtypeStruct((n, n_cols), out_dtype),
        # Rows are the inner (fastest) axis: each weight column-slab is DMA'd once
        # and reused across all row tiles.
        grid=(nc, nr),
        in_specs=in_specs,
        out_specs=pl.BlockSpec((block_rows, block_cols), lambda c, r: (r, c)),
        compiler_params=pltpu.CompilerParams(
            dimension_semantics=("parallel", "parallel"),
            vmem_limit_bytes=_VMEM_LIMIT_BYTES),
    )(*args)

    if pad_out:
        out = out[:, :c_out]
    return out.reshape(*orig_shape[:-1], c_out)


# ----------------------------------------------------------------------------
# Flash attention kernel (online softmax), grid = (batch, q_tiles, kv_tiles)
# ----------------------------------------------------------------------------
def _flash_attention_kernel(q_ref, k_ref, v_ref, o_ref, m_ref, l_ref, acc_ref, *,
                            scale, causal, seq_len, block_q, block_k, multi_query):
    q_idx = pl.program_id(1)
    kv_idx = pl.program_id(2)

    @pl.when(kv_idx == 0)
    def _init():
        m_ref[...] = jnp.full_like(m_ref, _NEG_INF)
        l_ref[...] = jnp.zeros_like(l_ref)
        acc_ref[...] = jnp.zeros_like(acc_ref)

    def _step():
        q = q_ref[0]                                   # (H, tq, Dh) bf16
        num_heads = q.shape[0]
        if multi_query:
            # Single shared K/V head: broadcast only the VMEM-resident tile
            # (no per-head HBM materialization).
            k = jnp.broadcast_to(k_ref[0], (num_heads,) + k_ref.shape[1:])
            v = jnp.broadcast_to(v_ref[0], (num_heads,) + v_ref.shape[1:])
        else:
            k = k_ref[0]                               # (H, tk, Dh) bf16
            v = v_ref[0]

        pad_kv = (seq_len % block_k) != 0
        if pad_kv:
            # Zero padded KV rows so garbage in the padded VMEM region cannot
            # poison the PV matmul.
            kv_valid = (kv_idx * block_k
                        + jax.lax.broadcasted_iota(jnp.int32, (1, block_k, 1), 1)
                        ) < seq_len
            v = jnp.where(kv_valid, v, jnp.zeros_like(v))

        # bf16 x bf16 on the MXU, f32 accumulation.
        s = jnp.einsum("hqd,hkd->hqk", q, k,
                       preferred_element_type=jnp.float32) * scale    # (H, tq, tk)

        if causal or pad_kv:
            k_pos = kv_idx * block_k + jax.lax.broadcasted_iota(
                jnp.int32, (1, block_q, block_k), 2)
            mask = None
            if pad_kv:
                mask = k_pos < seq_len
            if causal:
                q_pos = q_idx * block_q + jax.lax.broadcasted_iota(
                    jnp.int32, (1, block_q, block_k), 1)
                cmask = k_pos <= q_pos
                mask = cmask if mask is None else jnp.logical_and(mask, cmask)
            s = jnp.where(mask, s, _NEG_INF)

        m_prev = m_ref[...]                            # (H, tq, 1) f32
        m_new = jnp.maximum(m_prev, jnp.max(s, axis=-1, keepdims=True))
        alpha = jnp.exp(m_prev - m_new)
        p = jnp.exp(s - m_new)                         # (H, tq, tk) f32
        l_ref[...] = alpha * l_ref[...] + jnp.sum(p, axis=-1, keepdims=True)
        pv = jnp.einsum("hqk,hkd->hqd", p.astype(v.dtype), v,
                        preferred_element_type=jnp.float32)
        acc_ref[...] = alpha * acc_ref[...] + pv
        m_ref[...] = m_new

    if causal:
        # Skip kv tiles that lie entirely in the masked future of this q tile.
        @pl.when(kv_idx * block_k <= q_idx * block_q + (block_q - 1))
        def _():
            _step()
    else:
        _step()

    @pl.when(kv_idx == pl.num_programs(2) - 1)
    def _finalize():
        inv_l = pl.reciprocal(l_ref[...], approx=True)     # EUP, off the VPU path
        o_ref[0] = (acc_ref[...] * inv_l).astype(o_ref.dtype)


def flash_attention(q, k, v, *, causal=False):
    """q: (B, H, S, Dh).  k, v: (B, H, S, Dh) for MHA or (B, S, Dh) for MQA."""
    B, H, S, Dh = q.shape
    multi_query = (k.ndim == 3)
    block_q = S if S <= _MAX_BLOCK_SEQ else _MAX_BLOCK_SEQ
    block_k = S if S <= _MAX_BLOCK_SEQ else _MAX_BLOCK_SEQ
    nq, nk = pl.cdiv(S, block_q), pl.cdiv(S, block_k)

    kern = partial(_flash_attention_kernel, scale=1.0 / math.sqrt(Dh), causal=causal,
                   seq_len=S, block_q=block_q, block_k=block_k,
                   multi_query=multi_query)

    if multi_query:
        # K/V index_map ignores the head dimension: every head reads the same block.
        kv_spec = pl.BlockSpec((1, block_k, Dh), lambda b, qi, ki: (b, ki, 0))
    else:
        kv_spec = pl.BlockSpec((1, H, block_k, Dh), lambda b, qi, ki: (b, 0, ki, 0))

    return pl.pallas_call(
        kern,
        out_shape=jax.ShapeDtypeStruct((B, H, S, Dh), q.dtype),
        grid=(B, nq, nk),
        in_specs=[pl.BlockSpec((1, H, block_q, Dh), lambda b, qi, ki: (b, 0, qi, 0)),
                  kv_spec, kv_spec],
        out_specs=pl.BlockSpec((1, H, block_q, Dh), lambda b, qi, ki: (b, 0, qi, 0)),
        scratch_shapes=[pltpu.VMEM((H, block_q, 1), jnp.float32),    # m
                        pltpu.VMEM((H, block_q, 1), jnp.float32),    # l
                        pltpu.VMEM((H, block_q, Dh), jnp.float32)],  # acc
        compiler_params=pltpu.CompilerParams(
            dimension_semantics=("parallel", "parallel", "arbitrary"),
            vmem_limit_bytes=_VMEM_LIMIT_BYTES),
    )(q, k, v)


# ----------------------------------------------------------------------------
# Transformer forward (shared by the Pallas path and the pure-JAX reference)
# ----------------------------------------------------------------------------
def _forward(params, x, *, linear, attend, num_heads, multi_query, head_dim,
             is_causal=False):
    H, Dh = num_heads, head_dim
    h = linear(x.astype(COMPUTE_DTYPE), params["w_in"], params["b_in"])
    for p in params["blocks"]:
        *lead, S, _ = h.shape
        B = int(np.prod(lead)) if lead else 1

        # --- attention sub-block: LayerNorm fused into the QKV projection ---
        qkv = linear(h, p["w_qkv"], p["b_qkv"], apply_ln=True)
        qkv = qkv.reshape(B, S, -1)
        if multi_query:
            q = qkv[..., :H * Dh].reshape(B, S, H, Dh).transpose(0, 2, 1, 3)
            k = qkv[..., H * Dh:(H + 1) * Dh]                 # (B, S, Dh) — no broadcast
            v = qkv[..., (H + 1) * Dh:]
        else:
            t = qkv.reshape(B, S, 3, H, Dh).transpose(2, 0, 3, 1, 4)   # (3, B, H, S, Dh)
            q, k, v = t[0], t[1], t[2]
        a = attend(q, k, v, causal=is_causal)                 # (B, H, S, Dh)
        a = a.transpose(0, 2, 1, 3).reshape(*lead, S, H * Dh)
        h = linear(a, p["w_attn_out"], p["b_attn_out"], residual=h)

        # --- MLP sub-block: LayerNorm + GELU fused into the first matmul ---
        m = linear(h, p["w_mlp1"], p["b_mlp1"], apply_ln=True, activation="gelu")
        h = linear(m, p["w_mlp2"], p["b_mlp2"], residual=h)
    return linear(h, params["w_out"], params["b_out"], out_dtype=jnp.float32)


# ----------------------------------------------------------------------------
# Pure-JAX reference (same dtype policy: bf16 matmuls, f32 accumulation/softmax)
# ----------------------------------------------------------------------------
def _ref_linear(x, w, b, *, apply_ln=False, activation=None, residual=None,
                out_dtype=None):
    if apply_ln:
        xf = x.astype(jnp.float32)
        mu = jnp.mean(xf, axis=-1, keepdims=True)
        xc = xf - mu
        var = jnp.mean(xc * xc, axis=-1, keepdims=True)
        xw = (xc * jax.lax.rsqrt(var + _LN_EPS)).astype(w.dtype)
    else:
        xw = x.astype(w.dtype)
    y = jnp.dot(xw, w, preferred_element_type=jnp.float32) + b.astype(jnp.float32)
    if activation == "gelu":
        y = jax.nn.gelu(y)
    if residual is not None:
        y = y + residual.astype(jnp.float32)
    return y.astype(x.dtype if out_dtype is None else out_dtype)


def _ref_attend(q, k, v, *, causal=False):
    if k.ndim == q.ndim - 1:                       # multi-query
        k = jnp.broadcast_to(k[:, None], q.shape)
        v = jnp.broadcast_to(v[:, None], q.shape)
    scale = 1.0 / math.sqrt(q.shape[-1])
    s = jnp.einsum("bhqd,bhkd->bhqk", q, k, preferred_element_type=jnp.float32) * scale
    if causal:
        S = s.shape[-1]
        mask = jnp.tril(jnp.ones((S, S), dtype=bool))
        s = jnp.where(mask[None, None], s, _NEG_INF)
    m = jnp.max(s, axis=-1, keepdims=True)
    p = jnp.exp(s - m)
    p = p / jnp.sum(p, axis=-1, keepdims=True)
    o = jnp.einsum("bhqk,bhkd->bhqd", p.astype(v.dtype), v,
                   preferred_element_type=jnp.float32)
    return o.astype(q.dtype)


# ----------------------------------------------------------------------------
# Parameter init (nn.Linear-style uniform init; weights stored (in, out) bf16)
# ----------------------------------------------------------------------------
def _linear_init(key, fan_in, fan_out, dtype):
    kw, kb = jax.random.split(key)
    bound = 1.0 / math.sqrt(fan_in)
    w = jax.random.uniform(kw, (fan_in, fan_out), jnp.float32, -bound, bound)
    b = jax.random.uniform(kb, (fan_out,), jnp.float32, -bound, bound)
    return w.astype(dtype), b


def init_transformer_params(key, in_channels, out_channels, hidden_channels, *,
                            num_blocks=10, num_heads=8, increase_hidden_channels=1,
                            multi_query=False, dtype=COMPUTE_DTYPE):
    head_dim = hidden_channels // num_heads * increase_hidden_channels
    keys = jax.random.split(key, num_blocks + 2)
    w_in, b_in = _linear_init(keys[0], in_channels, hidden_channels, dtype)
    w_out, b_out = _linear_init(keys[1], hidden_channels, out_channels, dtype)
    # Fused QKV weight: output columns ordered (qkv, head, hidden) for MHA and
    # (q heads..., k, v) for MQA, so the split after the kernel is a contiguous
    # reshape/slice.  When porting trained PyTorch weights, permute columns once.
    qkv_out = (num_heads + 2) * head_dim if multi_query else 3 * num_heads * head_dim
    blocks = []
    for kb in keys[2:]:
        k1, k2, k3, k4 = jax.random.split(kb, 4)
        w_qkv, b_qkv = _linear_init(k1, hidden_channels, qkv_out, dtype)
        w_ao, b_ao = _linear_init(k2, num_heads * head_dim, hidden_channels, dtype)
        w_m1, b_m1 = _linear_init(k3, hidden_channels, 2 * hidden_channels, dtype)
        w_m2, b_m2 = _linear_init(k4, 2 * hidden_channels, hidden_channels, dtype)
        blocks.append(dict(w_qkv=w_qkv, b_qkv=b_qkv,
                           w_attn_out=w_ao, b_attn_out=b_ao,
                           w_mlp1=w_m1, b_mlp1=b_m1,
                           w_mlp2=w_m2, b_mlp2=b_m2))
    params = dict(w_in=w_in, b_in=b_in, w_out=w_out, b_out=b_out, blocks=blocks)
    config = dict(num_heads=num_heads, multi_query=multi_query, head_dim=head_dim)
    return params, config


# ----------------------------------------------------------------------------
# Demo / correctness check
# ----------------------------------------------------------------------------
if __name__ == "__main__":
    in_channels, out_channels, hidden_channels = 16, 16, 64
    num_blocks, num_heads = 2, 8
    batch, items = 2, 8

    root = jax.random.PRNGKey(0)
    kx, kp_mha, kp_mqa = jax.random.split(root, 3)
    x = jax.random.normal(kx, (batch, items, in_channels), dtype=jnp.float32)

    # Exercise both QKV variants (Transformer default multi_query=False plus MQA)
    # and both is_causal settings.
    for multi_query, is_causal, kp in ((False, False, kp_mha), (True, True, kp_mqa)):
        params, config = init_transformer_params(
            kp, in_channels, out_channels, hidden_channels,
            num_blocks=num_blocks, num_heads=num_heads,
            increase_hidden_channels=1, multi_query=multi_query)

        fwd = jax.jit(partial(_forward, linear=fused_linear, attend=flash_attention,
                              is_causal=is_causal, **config))
        out = jax.block_until_ready(fwd(params, x))

        ref = _forward(params, x, linear=_ref_linear, attend=_ref_attend,
                       is_causal=is_causal, **config)

        assert out.shape == (batch, items, out_channels)
        np.testing.assert_allclose(np.asarray(out), np.asarray(ref, dtype=np.float32),
                                   rtol=2e-2, atol=2e-2)

    print("KERNEL_OK")
</pallas_src>

<mosaic_0001>
module attributes {stable_mosaic.version = 11 : i64} {
  func.func @kernel(%arg0: i32, %arg1: i32, %arg2: memref<16x16xbf16, #tpu.memory_space<vmem>>, %arg3: memref<16x128xbf16, #tpu.memory_space<vmem>>, %arg4: memref<1x128xf32, #tpu.memory_space<vmem>>, %arg5: memref<16x128xbf16, #tpu.memory_space<vmem>>) attributes {dimension_semantics = [#tpu.dimension_semantics<parallel>, #tpu.dimension_semantics<parallel>], iteration_bounds = array<i64: 1, 1>, scalar_prefetch = 0 : i64, scratch_operands = 0 : i64, tpu.core_type = #tpu.core_type<tc>, window_params = [{transform_indices = @transform_0, window_bounds = array<i64: 16, 16>}, {transform_indices = @transform_1, window_bounds = array<i64: 16, 128>}, {transform_indices = @transform_2, window_bounds = array<i64: 1, 128>}, {transform_indices = @transform_3, window_bounds = array<i64: 16, 128>}]} {
    %c0 = arith.constant 0 : index
    %c0_0 = arith.constant 0 : index
    %0 = vector.load %arg2[%c0, %c0_0] : memref<16x16xbf16, #tpu.memory_space<vmem>>, vector<16x16xbf16>
    %c0_1 = arith.constant 0 : index
    %c0_2 = arith.constant 0 : index
    %1 = vector.load %arg3[%c0_1, %c0_2] : memref<16x128xbf16, #tpu.memory_space<vmem>>, vector<16x128xbf16>
    %cst = arith.constant dense<0.000000e+00> : vector<16x128xf32>
    %2 = tpu.matmul %0, %1, %cst {dimension_numbers = #tpu.dot_dimension_numbers<[1], [0], [0], [1], [0, 0, 1, 1], [], []>} : vector<16x16xbf16>, vector<16x128xbf16>, vector<16x128xf32> -> vector<16x128xf32>
    %c0_3 = arith.constant 0 : index
    %c0_4 = arith.constant 0 : index
    %3 = vector.load %arg4[%c0_3, %c0_4] : memref<1x128xf32, #tpu.memory_space<vmem>>, vector<1x128xf32>
    %4 = vector.broadcast %3 : vector<1x128xf32> to vector<16x128xf32>
    %5 = arith.addf %2, %4 : vector<16x128xf32>
    %6 = arith.truncf %5 : vector<16x128xf32> to vector<16x128xbf16>
    %c0_5 = arith.constant 0 : index
    %c0_6 = arith.constant 0 : index
    %7 = vector.load %arg5[%c0_5, %c0_6] : memref<16x128xbf16, #tpu.memory_space<vmem>>, vector<16x128xbf16>
    tpu.vector_store %arg5[%c0_5, %c0_6], %6 {strides = array<i32>} : memref<16x128xbf16, #tpu.memory_space<vmem>>, vector<16x128xbf16>,
    return
  }
  func.func @transform_0(%arg0: i32, %arg1: i32) -> (i32, i32) {
    %c0_i32 = arith.constant 0 : i32
    %c0_i32_0 = arith.constant 0 : i32
    return %arg1, %c0_i32 : i32, i32
  }
  func.func @transform_1(%arg0: i32, %arg1: i32) -> (i32, i32) {
    %c0_i32 = arith.constant 0 : i32
    %c0_i32_0 = arith.constant 0 : i32
    return %c0_i32, %arg0 : i32, i32
  }
  func.func @transform_2(%arg0: i32, %arg1: i32) -> (i32, i32) {
    %c0_i32 = arith.constant 0 : i32
    %c0_i32_0 = arith.constant 0 : i32
    return %c0_i32, %arg0 : i32, i32
  }
  func.func @transform_3(%arg0: i32, %arg1: i32) -> (i32, i32) {
    %c0_i32 = arith.constant 0 : i32
    return %arg1, %arg0 : i32, i32
  }
}

module attributes {stable_mosaic.version = 11 : i64} {
  func.func @kernel(%arg0: i32, %arg1: i32, %arg2: memref<16x64xbf16, #tpu.memory_space<vmem>>, %arg3: memref<64x192xbf16, #tpu.memory_space<vmem>>, %arg4: memref<1x192xf32, #tpu.memory_space<vmem>>, %arg5: memref<16x192xbf16, #tpu.memory_space<vmem>>) attributes {dimension_semantics = [#tpu.dimension_semantics<parallel>, #tpu.dimension_semantics<parallel>], iteration_bounds = array<i64: 1, 1>, scalar_prefetch = 0 : i64, scratch_operands = 0 : i64, tpu.core_type = #tpu.core_type<tc>, window_params = [{transform_indices = @transform_0, window_bounds = array<i64: 16, 64>}, {transform_indices = @transform_1, window_bounds = array<i64: 64, 192>}, {transform_indices = @transform_2, window_bounds = array<i64: 1, 192>}, {transform_indices = @transform_3, window_bounds = array<i64: 16, 192>}]} {
    %c0 = arith.constant 0 : index
    %c0_0 = arith.constant 0 : index
    %0 = vector.load %arg2[%c0, %c0_0] : memref<16x64xbf16, #tpu.memory_space<vmem>>, vector<16x64xbf16>
    %1 = arith.extf %0 : vector<16x64xbf16> to vector<16x64xf32>
    %cst = arith.constant dense<0.000000e+00> : vector<16xf32>
    %2 = vector.multi_reduction <add>, %1, %cst [1] : vector<16x64xf32> to vector<16xf32>
    %3 = vector.shape_cast %2 : vector<16xf32> to vector<16x1xf32>
    %cst_1 = arith.constant 6.400000e+01 : f32
    %4 = vector.broadcast %cst_1 : f32 to vector<16x1xf32>
    %5 = arith.divf %3, %4 : vector<16x1xf32>
    %6 = vector.broadcast %5 : vector<16x1xf32> to vector<16x64xf32>
    %7 = arith.subf %1, %6 : vector<16x64xf32>
    %8 = arith.mulf %7, %7 : vector<16x64xf32>
    %cst_2 = arith.constant dense<0.000000e+00> : vector<16xf32>
    %9 = vector.multi_reduction <add>, %8, %cst_2 [1] : vector<16x64xf32> to vector<16xf32>
    %10 = vector.shape_cast %9 : vector<16xf32> to vector<16x1xf32>
    %cst_3 = arith.constant 6.400000e+01 : f32
    %11 = vector.broadcast %cst_3 : f32 to vector<16x1xf32>
    %12 = arith.divf %10, %11 : vector<16x1xf32>
    %cst_4 = arith.constant 9.99999974E-6 : f32
    %13 = vector.broadcast %cst_4 : f32 to vector<16x1xf32>
    %14 = arith.addf %12, %13 : vector<16x1xf32>
    %15 = math.rsqrt %14 : vector<16x1xf32>
    %16 = vector.broadcast %15 : vector<16x1xf32> to vector<16x64xf32>
    %17 = arith.mulf %7, %16 : vector<16x64xf32>
    %18 = arith.truncf %17 : vector<16x64xf32> to vector<16x64xbf16>
    %c0_5 = arith.constant 0 : index
    %c0_6 = arith.constant 0 : index
    %19 = vector.load %arg3[%c0_5, %c0_6] : memref<64x192xbf16, #tpu.memory_space<vmem>>, vector<64x192xbf16>
    %cst_7 = arith.constant dense<0.000000e+00> : vector<16x192xf32>
    %20 = tpu.matmul %18, %19, %cst_7 {dimension_numbers = #tpu.dot_dimension_numbers<[1], [0], [0], [1], [0, 0, 1, 1], [], []>} : vector<16x64xbf16>, vector<64x192xbf16>, vector<16x192xf32> -> vector<16x192xf32>
    %c0_8 = arith.constant 0 : index
    %c0_9 = arith.constant 0 : index
    %21 = vector.load %arg4[%c0_8, %c0_9] : memref<1x192xf32, #tpu.memory_space<vmem>>, vector<1x192xf32>
    %22 = vector.broadcast %21 : vector<1x192xf32> to vector<16x192xf32>
    %23 = arith.addf %20, %22 : vector<16x192xf32>
    %24 = arith.truncf %23 : vector<16x192xf32> to vector<16x192xbf16>
    %c0_10 = arith.constant 0 : index
    %c0_11 = arith.constant 0 : index
    %25 = vector.load %arg5[%c0_10, %c0_11] : memref<16x192xbf16, #tpu.memory_space<vmem>>, vector<16x192xbf16>
    tpu.vector_store %arg5[%c0_10, %c0_11], %24 {strides = array<i32>} : memref<16x192xbf16, #tpu.memory_space<vmem>>, vector<16x192xbf16>,
    return
  }
  func.func @transform_0(%arg0: i32, %arg1: i32) -> (i32, i32) {
    %c0_i32 = arith.constant 0 : i32
    %c0_i32_0 = arith.constant 0 : i32
    return %arg1, %c0_i32 : i32, i32
  }
  func.func @transform_1(%arg0: i32, %arg1: i32) -> (i32, i32) {
    %c0_i32 = arith.constant 0 : i32
    %c0_i32_0 = arith.constant 0 : i32
    return %c0_i32, %arg0 : i32, i32
  }
  func.func @transform_2(%arg0: i32, %arg1: i32) -> (i32, i32) {
    %c0_i32 = arith.constant 0 : i32
    %c0_i32_0 = arith.constant 0 : i32
    return %c0_i32, %arg0 : i32, i32
  }
  func.func @transform_3(%arg0: i32, %arg1: i32) -> (i32, i32) {
    %c0_i32 = arith.constant 0 : i32
    return %arg1, %arg0 : i32, i32
  }
}

module attributes {stable_mosaic.version = 11 : i64} {
  func.func @_flash_attention_kernel(%arg0: i32, %arg1: i32, %arg2: i32, %arg3: memref<1x8x8x8xbf16, #tpu.memory_space<vmem>>, %arg4: memref<1x8x8x8xbf16, #tpu.memory_space<vmem>>, %arg5: memref<1x8x8x8xbf16, #tpu.memory_space<vmem>>, %arg6: memref<1x8x8x8xbf16, #tpu.memory_space<vmem>>, %arg7: memref<8x8x1xf32, #tpu.memory_space<vmem>>, %arg8: memref<8x8x1xf32, #tpu.memory_space<vmem>>, %arg9: memref<8x8x8xf32, #tpu.memory_space<vmem>>) attributes {dimension_semantics = [#tpu.dimension_semantics<parallel>, #tpu.dimension_semantics<parallel>, #tpu.dimension_semantics<arbitrary>], iteration_bounds = array<i64: 2, 1, 1>, scalar_prefetch = 0 : i64, scratch_operands = 3 : i64, tpu.core_type = #tpu.core_type<tc>, window_params = [{transform_indices = @transform_0, window_bounds = array<i64: 1, 8, 8, 8>}, {transform_indices = @transform_1, window_bounds = array<i64: 1, 8, 8, 8>}, {transform_indices = @transform_2, window_bounds = array<i64: 1, 8, 8, 8>}, {transform_indices = @transform_3, window_bounds = array<i64: 1, 8, 8, 8>}]} {
    %c0_i32 = arith.constant 0 : i32
    %0 = arith.cmpi eq, %arg2, %c0_i32 : i32
    %1 = arith.extui %0 : i1 to i32
    %c0_i32_0 = arith.constant 0 : i32
    %2 = arith.cmpi ne, %1, %c0_i32_0 : i32
    scf.if %2 {
      %cst_36 = arith.constant -1.000000e+30 : f32
      %38 = vector.broadcast %cst_36 : f32 to vector<8x8x1xf32>
      %c0_37 = arith.constant 0 : index
      %c0_38 = arith.constant 0 : index
      %c0_39 = arith.constant 0 : index
      %39 = vector.load %arg7[%c0_37, %c0_38, %c0_39] : memref<8x8x1xf32, #tpu.memory_space<vmem>>, vector<8x8x1xf32>
      tpu.vector_store %arg7[%c0_37, %c0_38, %c0_39], %38 {strides = array<i32>} : memref<8x8x1xf32, #tpu.memory_space<vmem>>, vector<8x8x1xf32>,
      %cst_40 = arith.constant 0.000000e+00 : f32
      %40 = vector.broadcast %cst_40 : f32 to vector<8x8x1xf32>
      %c0_41 = arith.constant 0 : index
      %c0_42 = arith.constant 0 : index
      %c0_43 = arith.constant 0 : index
      %41 = vector.load %arg8[%c0_41, %c0_42, %c0_43] : memref<8x8x1xf32, #tpu.memory_space<vmem>>, vector<8x8x1xf32>
      tpu.vector_store %arg8[%c0_41, %c0_42, %c0_43], %40 {strides = array<i32>} : memref<8x8x1xf32, #tpu.memory_space<vmem>>, vector<8x8x1xf32>,
      %cst_44 = arith.constant 0.000000e+00 : f32
      %42 = vector.broadcast %cst_44 : f32 to vector<8x8x8xf32>
      %c0_45 = arith.constant 0 : index
      %c0_46 = arith.constant 0 : index
      %c0_47 = arith.constant 0 : index
      %43 = vector.load %arg9[%c0_45, %c0_46, %c0_47] : memref<8x8x8xf32, #tpu.memory_space<vmem>>, vector<8x8x8xf32>
      tpu.vector_store %arg9[%c0_45, %c0_46, %c0_47], %42 {strides = array<i32>} : memref<8x8x8xf32, #tpu.memory_space<vmem>>, vector<8x8x8xf32>,
    } else {
    }
    %c0 = arith.constant 0 : index
    %c0_1 = arith.constant 0 : index
    %c0_2 = arith.constant 0 : index
    %c0_3 = arith.constant 0 : index
    %3 = vector.load %arg3[%c0, %c0_1, %c0_2, %c0_3] : memref<1x8x8x8xbf16, #tpu.memory_space<vmem>>, vector<1x8x8x8xbf16>
    %4 = vector.shape_cast %3 : vector<1x8x8x8xbf16> to vector<8x8x8xbf16>
    %c0_4 = arith.constant 0 : index
    %c0_5 = arith.constant 0 : index
    %c0_6 = arith.constant 0 : index
    %c0_7 = arith.constant 0 : index
    %5 = vector.load %arg4[%c0_4, %c0_5, %c0_6, %c0_7] : memref<1x8x8x8xbf16, #tpu.memory_space<vmem>>, vector<1x8x8x8xbf16>
    %6 = vector.shape_cast %5 : vector<1x8x8x8xbf16> to vector<8x8x8xbf16>
    %c0_8 = arith.constant 0 : index
    %c0_9 = arith.constant 0 : index
    %c0_10 = arith.constant 0 : index
    %c0_11 = arith.constant 0 : index
    %7 = vector.load %arg5[%c0_8, %c0_9, %c0_10, %c0_11] : memref<1x8x8x8xbf16, #tpu.memory_space<vmem>>, vector<1x8x8x8xbf16>
    %8 = vector.shape_cast %7 : vector<1x8x8x8xbf16> to vector<8x8x8xbf16>
    "tpu.trace_start"() <{level = 10 : i32, message = "hqd,hkd->hqk"}> : () -> ()
    %cst = arith.constant dense<0.000000e+00> : vector<8x8x8xf32>
    %9 = tpu.matmul %4, %6, %cst {dimension_numbers = #tpu.dot_dimension_numbers<[2], [2], [1], [1], [0, 0, 0, 1, 1, 1], [0], [0]>} : vector<8x8x8xbf16>, vector<8x8x8xbf16>, vector<8x8x8xf32> -> vector<8x8x8xf32>
    "tpu.trace_stop"() : () -> ()
    %cst_12 = arith.constant 0.353553385 : f32
    %10 = vector.broadcast %cst_12 : f32 to vector<8x8x8xf32>
    %11 = arith.mulf %9, %10 : vector<8x8x8xf32>
    %c0_13 = arith.constant 0 : index
    %c0_14 = arith.constant 0 : index
    %c0_15 = arith.constant 0 : index
    %12 = vector.load %arg7[%c0_13, %c0_14, %c0_15] : memref<8x8x1xf32, #tpu.memory_space<vmem>>, vector<8x8x1xf32>
    %cst_16 = arith.constant dense<0xFF800000> : vector<8x8xf32>
    %13 = vector.multi_reduction <maximumf>, %11, %cst_16 [2] : vector<8x8x8xf32> to vector<8x8xf32>
    %14 = vector.shape_cast %13 : vector<8x8xf32> to vector<8x8x1xf32>
    %15 = arith.maximumf %12, %14 : vector<8x8x1xf32>
    %16 = arith.subf %12, %15 : vector<8x8x1xf32>
    %17 = math.exp %16 : vector<8x8x1xf32>
    %18 = vector.broadcast %15 : vector<8x8x1xf32> to vector<8x8x8xf32>
    %19 = arith.subf %11, %18 : vector<8x8x8xf32>
    %20 = math.exp %19 : vector<8x8x8xf32>
    %c0_17 = arith.constant 0 : index
    %c0_18 = arith.constant 0 : index
    %c0_19 = arith.constant 0 : index
    %21 = vector.load %arg8[%c0_17, %c0_18, %c0_19] : memref<8x8x1xf32, #tpu.memory_space<vmem>>, vector<8x8x1xf32>
    %22 = arith.mulf %17, %21 : vector<8x8x1xf32>
    %cst_20 = arith.constant dense<0.000000e+00> : vector<8x8xf32>
    %23 = vector.multi_reduction <add>, %20, %cst_20 [2] : vector<8x8x8xf32> to vector<8x8xf32>
    %24 = vector.shape_cast %23 : vector<8x8xf32> to vector<8x8x1xf32>
    %25 = arith.addf %22, %24 : vector<8x8x1xf32>
    %c0_21 = arith.constant 0 : index
    %c0_22 = arith.constant 0 : index
    %c0_23 = arith.constant 0 : index
    %26 = vector.load %arg8[%c0_21, %c0_22, %c0_23] : memref<8x8x1xf32, #tpu.memory_space<vmem>>, vector<8x8x1xf32>
    tpu.vector_store %arg8[%c0_21, %c0_22, %c0_23], %25 {strides = array<i32>} : memref<8x8x1xf32, #tpu.memory_space<vmem>>, vector<8x8x1xf32>,
    %27 = arith.truncf %20 : vector<8x8x8xf32> to vector<8x8x8xbf16>
    "tpu.trace_start"() <{level = 10 : i32, message = "hqk,hkd->hqd"}> : () -> ()
    %cst_24 = arith.constant dense<0.000000e+00> : vector<8x8x8xf32>
    %28 = tpu.matmul %27, %8, %cst_24 {dimension_numbers = #tpu.dot_dimension_numbers<[2], [1], [1], [2], [0, 0, 0, 1, 1, 2], [0], [0]>} : vector<8x8x8xbf16>, vector<8x8x8xbf16>, vector<8x8x8xf32> -> vector<8x8x8xf32>
    "tpu.trace_stop"() : () -> ()
    %c0_25 = arith.constant 0 : index
    %c0_26 = arith.constant 0 : index
    %c0_27 = arith.constant 0 : index
    %29 = vector.load %arg9[%c0_25, %c0_26, %c0_27] : memref<8x8x8xf32, #tpu.memory_space<vmem>>, vector<8x8x8xf32>
    %30 = vector.broadcast %17 : vector<8x8x1xf32> to vector<8x8x8xf32>
    %31 = arith.mulf %30, %29 : vector<8x8x8xf32>
    %32 = arith.addf %31, %28 : vector<8x8x8xf32>
    %c0_28 = arith.constant 0 : index
    %c0_29 = arith.constant 0 : index
    %c0_30 = arith.constant 0 : index
    %33 = vector.load %arg9[%c0_28, %c0_29, %c0_30] : memref<8x8x8xf32, #tpu.memory_space<vmem>>, vector<8x8x8xf32>
    tpu.vector_store %arg9[%c0_28, %c0_29, %c0_30], %32 {strides = array<i32>} : memref<8x8x8xf32, #tpu.memory_space<vmem>>, vector<8x8x8xf32>,
    %c0_31 = arith.constant 0 : index
    %c0_32 = arith.constant 0 : index
    %c0_33 = arith.constant 0 : index
    %34 = vector.load %arg7[%c0_31, %c0_32, %c0_33] : memref<8x8x1xf32, #tpu.memory_space<vmem>>, vector<8x8x1xf32>
    tpu.vector_store %arg7[%c0_31, %c0_32, %c0_33], %15 {strides = array<i32>} : memref<8x8x1xf32, #tpu.memory_space<vmem>>, vector<8x8x1xf32>,
    %c0_i32_34 = arith.constant 0 : i32
    %35 = arith.cmpi eq, %arg2, %c0_i32_34 : i32
    %36 = arith.extui %35 : i1 to i32
    %c0_i32_35 = arith.constant 0 : i32
    %37 = arith.cmpi ne, %36, %c0_i32_35 : i32
    scf.if %37 {
      %c0_36 = arith.constant 0 : index
      %c0_37 = arith.constant 0 : index
      %c0_38 = arith.constant 0 : index
      %38 = vector.load %arg8[%c0_36, %c0_37, %c0_38] : memref<8x8x1xf32, #tpu.memory_space<vmem>>, vector<8x8x1xf32>
      %39 = tpu.reciprocal %38 {approx = true} : vector<8x8x1xf32> -> vector<8x8x1xf32>
      %c0_39 = arith.constant 0 : index
      %c0_40 = arith.constant 0 : index
      %c0_41 = arith.constant 0 : index
      %40 = vector.load %arg9[%c0_39, %c0_40, %c0_41] : memref<8x8x8xf32, #tpu.memory_space<vmem>>, vector<8x8x8xf32>
      %41 = vector.broadcast %39 : vector<8x8x1xf32> to vector<8x8x8xf32>
      %42 = arith.mulf %40, %41 : vector<8x8x8xf32>
      %43 = arith.truncf %42 : vector<8x8x8xf32> to vector<8x8x8xbf16>
      %c0_42 = arith.constant 0 : index
      %c0_43 = arith.constant 0 : index
      %c0_44 = arith.constant 0 : index
      %c0_45 = arith.constant 0 : index
      %44 = vector.load %arg6[%c0_42, %c0_43, %c0_44, %c0_45] : memref<1x8x8x8xbf16, #tpu.memory_space<vmem>>, vector<1x8x8x8xbf16>
      %45 = vector.shape_cast %44 : vector<1x8x8x8xbf16> to vector<8x8x8xbf16>
      %46 = vector.shape_cast %43 : vector<8x8x8xbf16> to vector<1x8x8x8xbf16>
      tpu.vector_store %arg6[%c0_42, %c0_43, %c0_44, %c0_45], %46 {strides = array<i32>} : memref<1x8x8x8xbf16, #tpu.memory_space<vmem>>, vector<1x8x8x8xbf16>,
    } else {
    }
    return
  }
  func.func @transform_0(%arg0: i32, %arg1: i32, %arg2: i32) -> (i32, i32, i32, i32) {
    %c0_i32 = arith.constant 0 : i32
    %c0_i32_0 = arith.constant 0 : i32
    %c0_i32_1 = arith.constant 0 : i32
    return %arg0, %c0_i32, %arg1, %c0_i32_0 : i32, i32, i32, i32
  }
  func.func @transform_1(%arg0: i32, %arg1: i32, %arg2: i32) -> (i32, i32, i32, i32) {
    %c0_i32 = arith.constant 0 : i32
    %c0_i32_0 = arith.constant 0 : i32
    %c0_i32_1 = arith.constant 0 : i32
    return %arg0, %c0_i32, %arg2, %c0_i32_0 : i32, i32, i32, i32
  }
  func.func @transform_2(%arg0: i32, %arg1: i32, %arg2: i32) -> (i32, i32, i32, i32) {
    %c0_i32 = arith.constant 0 : i32
    %c0_i32_0 = arith.constant 0 : i32
    %c0_i32_1 = arith.constant 0 : i32
    return %arg0, %c0_i32, %arg2, %c0_i32_0 : i32, i32, i32, i32
  }
  func.func @transform_3(%arg0: i32, %arg1: i32, %arg2: i32) -> (i32, i32, i32, i32) {
    %c0_i32 = arith.constant 0 : i32
    %c0_i32_0 = arith.constant 0 : i32
    %c0_i32_1 = arith.constant 0 : i32
    return %arg0, %c0_i32, %arg1, %c0_i32_0 : i32, i32, i32, i32
  }
}

module attributes {stable_mosaic.version = 11 : i64} {
  func.func @kernel(%arg0: i32, %arg1: i32, %arg2: memref<16x64xbf16, #tpu.memory_space<vmem>>, %arg3: memref<64x64xbf16, #tpu.memory_space<vmem>>, %arg4: memref<1x64xf32, #tpu.memory_space<vmem>>, %arg5: memref<16x64xbf16, #tpu.memory_space<vmem>>, %arg6: memref<16x64xbf16, #tpu.memory_space<vmem>>) attributes {dimension_semantics = [#tpu.dimension_semantics<parallel>, #tpu.dimension_semantics<parallel>], iteration_bounds = array<i64: 1, 1>, scalar_prefetch = 0 : i64, scratch_operands = 0 : i64, tpu.core_type = #tpu.core_type<tc>, window_params = [{transform_indices = @transform_0, window_bounds = array<i64: 16, 64>}, {transform_indices = @transform_1, window_bounds = array<i64: 64, 64>}, {transform_indices = @transform_2, window_bounds = array<i64: 1, 64>}, {transform_indices = @transform_3, window_bounds = array<i64: 16, 64>}, {transform_indices = @transform_4, window_bounds = array<i64: 16, 64>}]} {
    %c0 = arith.constant 0 : index
    %c0_0 = arith.constant 0 : index
    %0 = vector.load %arg2[%c0, %c0_0] : memref<16x64xbf16, #tpu.memory_space<vmem>>, vector<16x64xbf16>
    %c0_1 = arith.constant 0 : index
    %c0_2 = arith.constant 0 : index
    %1 = vector.load %arg3[%c0_1, %c0_2] : memref<64x64xbf16, #tpu.memory_space<vmem>>, vector<64x64xbf16>
    %cst = arith.constant dense<0.000000e+00> : vector<16x64xf32>
    %2 = tpu.matmul %0, %1, %cst {dimension_numbers = #tpu.dot_dimension_numbers<[1], [0], [0], [1], [0, 0, 1, 1], [], []>} : vector<16x64xbf16>, vector<64x64xbf16>, vector<16x64xf32> -> vector<16x64xf32>
    %c0_3 = arith.constant 0 : index
    %c0_4 = arith.constant 0 : index
    %3 = vector.load %arg4[%c0_3, %c0_4] : memref<1x64xf32, #tpu.memory_space<vmem>>, vector<1x64xf32>
    %4 = vector.broadcast %3 : vector<1x64xf32> to vector<16x64xf32>
    %5 = arith.addf %2, %4 : vector<16x64xf32>
    %c0_5 = arith.constant 0 : index
    %c0_6 = arith.constant 0 : index
    %6 = vector.load %arg5[%c0_5, %c0_6] : memref<16x64xbf16, #tpu.memory_space<vmem>>, vector<16x64xbf16>
    %7 = arith.extf %6 : vector<16x64xbf16> to vector<16x64xf32>
    %8 = arith.addf %5, %7 : vector<16x64xf32>
    %9 = arith.truncf %8 : vector<16x64xf32> to vector<16x64xbf16>
    %c0_7 = arith.constant 0 : index
    %c0_8 = arith.constant 0 : index
    %10 = vector.load %arg6[%c0_7, %c0_8] : memref<16x64xbf16, #tpu.memory_space<vmem>>, vector<16x64xbf16>
    tpu.vector_store %arg6[%c0_7, %c0_8], %9 {strides = array<i32>} : memref<16x64xbf16, #tpu.memory_space<vmem>>, vector<16x64xbf16>,
    return
  }
  func.func @transform_0(%arg0: i32, %arg1: i32) -> (i32, i32) {
    %c0_i32 = arith.constant 0 : i32
    %c0_i32_0 = arith.constant 0 : i32
    return %arg1, %c0_i32 : i32, i32
  }
  func.func @transform_1(%arg0: i32, %arg1: i32) -> (i32, i32) {
    %c0_i32 = arith.constant 0 : i32
    %c0_i32_0 = arith.constant 0 : i32
    return %c0_i32, %arg0 : i32, i32
  }
  func.func @transform_2(%arg0: i32, %arg1: i32) -> (i32, i32) {
    %c0_i32 = arith.constant 0 : i32
    %c0_i32_0 = arith.constant 0 : i32
    return %c0_i32, %arg0 : i32, i32
  }
  func.func @transform_3(%arg0: i32, %arg1: i32) -> (i32, i32) {
    %c0_i32 = arith.constant 0 : i32
    return %arg1, %arg0 : i32, i32
  }
  func.func @transform_4(%arg0: i32, %arg1: i32) -> (i32, i32) {
    %c0_i32 = arith.constant 0 : i32
    return %arg1, %arg0 : i32, i32
  }
}

module attributes {stable_mosaic.version = 11 : i64} {
  func.func @kernel(%arg0: i32, %arg1: i32, %arg2: memref<16x128xbf16, #tpu.memory_space<vmem>>, %arg3: memref<128x64xbf16, #tpu.memory_space<vmem>>, %arg4: memref<1x64xf32, #tpu.memory_space<vmem>>, %arg5: memref<16x64xbf16, #tpu.memory_space<vmem>>, %arg6: memref<16x64xbf16, #tpu.memory_space<vmem>>) attributes {dimension_semantics = [#tpu.dimension_semantics<parallel>, #tpu.dimension_semantics<parallel>], iteration_bounds = array<i64: 1, 1>, scalar_prefetch = 0 : i64, scratch_operands = 0 : i64, tpu.core_type = #tpu.core_type<tc>, window_params = [{transform_indices = @transform_0, window_bounds = array<i64: 16, 128>}, {transform_indices = @transform_1, window_bounds = array<i64: 128, 64>}, {transform_indices = @transform_2, window_bounds = array<i64: 1, 64>}, {transform_indices = @transform_3, window_bounds = array<i64: 16, 64>}, {transform_indices = @transform_4, window_bounds = array<i64: 16, 64>}]} {
    %c0 = arith.constant 0 : index
    %c0_0 = arith.constant 0 : index
    %0 = vector.load %arg2[%c0, %c0_0] : memref<16x128xbf16, #tpu.memory_space<vmem>>, vector<16x128xbf16>
    %c0_1 = arith.constant 0 : index
    %c0_2 = arith.constant 0 : index
    %1 = vector.load %arg3[%c0_1, %c0_2] : memref<128x64xbf16, #tpu.memory_space<vmem>>, vector<128x64xbf16>
    %cst = arith.constant dense<0.000000e+00> : vector<16x64xf32>
    %2 = tpu.matmul %0, %1, %cst {dimension_numbers = #tpu.dot_dimension_numbers<[1], [0], [0], [1], [0, 0, 1, 1], [], []>} : vector<16x128xbf16>, vector<128x64xbf16>, vector<16x64xf32> -> vector<16x64xf32>
    %c0_3 = arith.constant 0 : index
    %c0_4 = arith.constant 0 : index
    %3 = vector.load %arg4[%c0_3, %c0_4] : memref<1x64xf32, #tpu.memory_space<vmem>>, vector<1x64xf32>
    %4 = vector.broadcast %3 : vector<1x64xf32> to vector<16x64xf32>
    %5 = arith.addf %2, %4 : vector<16x64xf32>
    %c0_5 = arith.constant 0 : index
    %c0_6 = arith.constant 0 : index
    %6 = vector.load %arg5[%c0_5, %c0_6] : memref<16x64xbf16, #tpu.memory_space<vmem>>, vector<16x64xbf16>
    %7 = arith.extf %6 : vector<16x64xbf16> to vector<16x64xf32>
    %8 = arith.addf %5, %7 : vector<16x64xf32>
    %9 = arith.truncf %8 : vector<16x64xf32> to vector<16x64xbf16>
    %c0_7 = arith.constant 0 : index
    %c0_8 = arith.constant 0 : index
    %10 = vector.load %arg6[%c0_7, %c0_8] : memref<16x64xbf16, #tpu.memory_space<vmem>>, vector<16x64xbf16>
    tpu.vector_store %arg6[%c0_7, %c0_8], %9 {strides = array<i32>} : memref<16x64xbf16, #tpu.memory_space<vmem>>, vector<16x64xbf16>,
    return
  }
  func.func @transform_0(%arg0: i32, %arg1: i32) -> (i32, i32) {
    %c0_i32 = arith.constant 0 : i32
    %c0_i32_0 = arith.constant 0 : i32
    return %arg1, %c0_i32 : i32, i32
  }
  func.func @transform_1(%arg0: i32, %arg1: i32) -> (i32, i32) {
    %c0_i32 = arith.constant 0 : i32
    %c0_i32_0 = arith.constant 0 : i32
    return %c0_i32, %arg0 : i32, i32
  }
  func.func @transform_2(%arg0: i32, %arg1: i32) -> (i32, i32) {
    %c0_i32 = arith.constant 0 : i32
    %c0_i32_0 = arith.constant 0 : i32
    return %c0_i32, %arg0 : i32, i32
  }
  func.func @transform_3(%arg0: i32, %arg1: i32) -> (i32, i32) {
    %c0_i32 = arith.constant 0 : i32
    return %arg1, %arg0 : i32, i32
  }
  func.func @transform_4(%arg0: i32, %arg1: i32) -> (i32, i32) {
    %c0_i32 = arith.constant 0 : i32
    return %arg1, %arg0 : i32, i32
  }
}

module attributes {stable_mosaic.version = 11 : i64} {
  func.func @kernel(%arg0: i32, %arg1: i32, %arg2: memref<16x64xbf16, #tpu.memory_space<vmem>>, %arg3: memref<64x128xbf16, #tpu.memory_space<vmem>>, %arg4: memref<1x128xf32, #tpu.memory_space<vmem>>, %arg5: memref<16x128xbf16, #tpu.memory_space<vmem>>) attributes {dimension_semantics = [#tpu.dimension_semantics<parallel>, #tpu.dimension_semantics<parallel>], iteration_bounds = array<i64: 1, 1>, scalar_prefetch = 0 : i64, scratch_operands = 0 : i64, tpu.core_type = #tpu.core_type<tc>, window_params = [{transform_indices = @transform_0, window_bounds = array<i64: 16, 64>}, {transform_indices = @transform_1, window_bounds = array<i64: 64, 128>}, {transform_indices = @transform_2, window_bounds = array<i64: 1, 128>}, {transform_indices = @transform_3, window_bounds = array<i64: 16, 128>}]} {
    %c0 = arith.constant 0 : index
    %c0_0 = arith.constant 0 : index
    %0 = vector.load %arg2[%c0, %c0_0] : memref<16x64xbf16, #tpu.memory_space<vmem>>, vector<16x64xbf16>
    %1 = arith.extf %0 : vector<16x64xbf16> to vector<16x64xf32>
    %cst = arith.constant dense<0.000000e+00> : vector<16xf32>
    %2 = vector.multi_reduction <add>, %1, %cst [1] : vector<16x64xf32> to vector<16xf32>
    %3 = vector.shape_cast %2 : vector<16xf32> to vector<16x1xf32>
    %cst_1 = arith.constant 6.400000e+01 : f32
    %4 = vector.broadcast %cst_1 : f32 to vector<16x1xf32>
    %5 = arith.divf %3, %4 : vector<16x1xf32>
    %6 = vector.broadcast %5 : vector<16x1xf32> to vector<16x64xf32>
    %7 = arith.subf %1, %6 : vector<16x64xf32>
    %8 = arith.mulf %7, %7 : vector<16x64xf32>
    %cst_2 = arith.constant dense<0.000000e+00> : vector<16xf32>
    %9 = vector.multi_reduction <add>, %8, %cst_2 [1] : vector<16x64xf32> to vector<16xf32>
    %10 = vector.shape_cast %9 : vector<16xf32> to vector<16x1xf32>
    %cst_3 = arith.constant 6.400000e+01 : f32
    %11 = vector.broadcast %cst_3 : f32 to vector<16x1xf32>
    %12 = arith.divf %10, %11 : vector<16x1xf32>
    %cst_4 = arith.constant 9.99999974E-6 : f32
    %13 = vector.broadcast %cst_4 : f32 to vector<16x1xf32>
    %14 = arith.addf %12, %13 : vector<16x1xf32>
    %15 = math.rsqrt %14 : vector<16x1xf32>
    %16 = vector.broadcast %15 : vector<16x1xf32> to vector<16x64xf32>
    %17 = arith.mulf %7, %16 : vector<16x64xf32>
    %18 = arith.truncf %17 : vector<16x64xf32> to vector<16x64xbf16>
    %c0_5 = arith.constant 0 : index
    %c0_6 = arith.constant 0 : index
    %19 = vector.load %arg3[%c0_5, %c0_6] : memref<64x128xbf16, #tpu.memory_space<vmem>>, vector<64x128xbf16>
    %cst_7 = arith.constant dense<0.000000e+00> : vector<16x128xf32>
    %20 = tpu.matmul %18, %19, %cst_7 {dimension_numbers = #tpu.dot_dimension_numbers<[1], [0], [0], [1], [0, 0, 1, 1], [], []>} : vector<16x64xbf16>, vector<64x128xbf16>, vector<16x128xf32> -> vector<16x128xf32>
    %c0_8 = arith.constant 0 : index
    %c0_9 = arith.constant 0 : index
    %21 = vector.load %arg4[%c0_8, %c0_9] : memref<1x128xf32, #tpu.memory_space<vmem>>, vector<1x128xf32>
    %22 = vector.broadcast %21 : vector<1x128xf32> to vector<16x128xf32>
    %23 = arith.addf %20, %22 : vector<16x128xf32>
    %24 = arith.mulf %23, %23 : vector<16x128xf32>
    %25 = arith.mulf %23, %24 : vector<16x128xf32>
    %cst_10 = arith.constant 4.471500e-02 : f32
    %26 = vector.broadcast %cst_10 : f32 to vector<16x128xf32>
    %27 = arith.mulf %26, %25 : vector<16x128xf32>
    %28 = arith.addf %23, %27 : vector<16x128xf32>
    %cst_11 = arith.constant 0.797884583 : f32
    %29 = vector.broadcast %cst_11 : f32 to vector<16x128xf32>
    %30 = arith.mulf %29, %28 : vector<16x128xf32>
    %31 = math.tanh %30 : vector<16x128xf32>
    %cst_12 = arith.constant 1.000000e+00 : f32
    %32 = vector.broadcast %cst_12 : f32 to vector<16x128xf32>
    %33 = arith.addf %32, %31 : vector<16x128xf32>
    %cst_13 = arith.constant 5.000000e-01 : f32
    %34 = vector.broadcast %cst_13 : f32 to vector<16x128xf32>
    %35 = arith.mulf %34, %33 : vector<16x128xf32>
    %36 = arith.mulf %23, %35 : vector<16x128xf32>
    %37 = arith.truncf %36 : vector<16x128xf32> to vector<16x128xbf16>
    %c0_14 = arith.constant 0 : index
    %c0_15 = arith.constant 0 : index
    %38 = vector.load %arg5[%c0_14, %c0_15] : memref<16x128xbf16, #tpu.memory_space<vmem>>, vector<16x128xbf16>
    tpu.vector_store %arg5[%c0_14, %c0_15], %37 {strides = array<i32>} : memref<16x128xbf16, #tpu.memory_space<vmem>>, vector<16x128xbf16>,
    return
  }
  func.func @transform_0(%arg0: i32, %arg1: i32) -> (i32, i32) {
    %c0_i32 = arith.constant 0 : i32
    %c0_i32_0 = arith.constant 0 : i32
    return %arg1, %c0_i32 : i32, i32
  }
  func.func @transform_1(%arg0: i32, %arg1: i32) -> (i32, i32) {
    %c0_i32 = arith.constant 0 : i32
    %c0_i32_0 = arith.constant 0 : i32
    return %c0_i32, %arg0 : i32, i32
  }
  func.func @transform_2(%arg0: i32, %arg1: i32) -> (i32, i32) {
    %c0_i32 = arith.constant 0 : i32
    %c0_i32_0 = arith.constant 0 : i32
    return %c0_i32, %arg0 : i32, i32
  }
  func.func @transform_3(%arg0: i32, %arg1: i32) -> (i32, i32) {
    %c0_i32 = arith.constant 0 : i32
    return %arg1, %arg0 : i32, i32
  }
}

module attributes {stable_mosaic.version = 11 : i64} {
  func.func @kernel(%arg0: i32, %arg1: i32, %arg2: memref<16x64xbf16, #tpu.memory_space<vmem>>, %arg3: memref<64x192xbf16, #tpu.memory_space<vmem>>, %arg4: memref<1x192xf32, #tpu.memory_space<vmem>>, %arg5: memref<16x192xbf16, #tpu.memory_space<vmem>>) attributes {dimension_semantics = [#tpu.dimension_semantics<parallel>, #tpu.dimension_semantics<parallel>], iteration_bounds = array<i64: 1, 1>, scalar_prefetch = 0 : i64, scratch_operands = 0 : i64, tpu.core_type = #tpu.core_type<tc>, window_params = [{transform_indices = @transform_0, window_bounds = array<i64: 16, 64>}, {transform_indices = @transform_1, window_bounds = array<i64: 64, 192>}, {transform_indices = @transform_2, window_bounds = array<i64: 1, 192>}, {transform_indices = @transform_3, window_bounds = array<i64: 16, 192>}]} {
    %c0 = arith.constant 0 : index
    %c0_0 = arith.constant 0 : index
    %0 = vector.load %arg2[%c0, %c0_0] : memref<16x64xbf16, #tpu.memory_space<vmem>>, vector<16x64xbf16>
    %1 = arith.extf %0 : vector<16x64xbf16> to vector<16x64xf32>
    %cst = arith.constant dense<0.000000e+00> : vector<16xf32>
    %2 = vector.multi_reduction <add>, %1, %cst [1] : vector<16x64xf32> to vector<16xf32>
    %3 = vector.shape_cast %2 : vector<16xf32> to vector<16x1xf32>
    %cst_1 = arith.constant 6.400000e+01 : f32
    %4 = vector.broadcast %cst_1 : f32 to vector<16x1xf32>
    %5 = arith.divf %3, %4 : vector<16x1xf32>
    %6 = vector.broadcast %5 : vector<16x1xf32> to vector<16x64xf32>
    %7 = arith.subf %1, %6 : vector<16x64xf32>
    %8 = arith.mulf %7, %7 : vector<16x64xf32>
    %cst_2 = arith.constant dense<0.000000e+00> : vector<16xf32>
    %9 = vector.multi_reduction <add>, %8, %cst_2 [1] : vector<16x64xf32> to vector<16xf32>
    %10 = vector.shape_cast %9 : vector<16xf32> to vector<16x1xf32>
    %cst_3 = arith.constant 6.400000e+01 : f32
    %11 = vector.broadcast %cst_3 : f32 to vector<16x1xf32>
    %12 = arith.divf %10, %11 : vector<16x1xf32>
    %cst_4 = arith.constant 9.99999974E-6 : f32
    %13 = vector.broadcast %cst_4 : f32 to vector<16x1xf32>
    %14 = arith.addf %12, %13 : vector<16x1xf32>
    %15 = math.rsqrt %14 : vector<16x1xf32>
    %16 = vector.broadcast %15 : vector<16x1xf32> to vector<16x64xf32>
    %17 = arith.mulf %7, %16 : vector<16x64xf32>
    %18 = arith.truncf %17 : vector<16x64xf32> to vector<16x64xbf16>
    %c0_5 = arith.constant 0 : index
    %c0_6 = arith.constant 0 : index
    %19 = vector.load %arg3[%c0_5, %c0_6] : memref<64x192xbf16, #tpu.memory_space<vmem>>, vector<64x192xbf16>
    %cst_7 = arith.constant dense<0.000000e+00> : vector<16x192xf32>
    %20 = tpu.matmul %18, %19, %cst_7 {dimension_numbers = #tpu.dot_dimension_numbers<[1], [0], [0], [1], [0, 0, 1, 1], [], []>} : vector<16x64xbf16>, vector<64x192xbf16>, vector<16x192xf32> -> vector<16x192xf32>
    %c0_8 = arith.constant 0 : index
    %c0_9 = arith.constant 0 : index
    %21 = vector.load %arg4[%c0_8, %c0_9] : memref<1x192xf32, #tpu.memory_space<vmem>>, vector<1x192xf32>
    %22 = vector.broadcast %21 : vector<1x192xf32> to vector<16x192xf32>
    %23 = arith.addf %20, %22 : vector<16x192xf32>
    %24 = arith.truncf %23 : vector<16x192xf32> to vector<16x192xbf16>
    %c0_10 = arith.constant 0 : index
    %c0_11 = arith.constant 0 : index
    %25 = vector.load %arg5[%c0_10, %c0_11] : memref<16x192xbf16, #tpu.memory_space<vmem>>, vector<16x192xbf16>
    tpu.vector_store %arg5[%c0_10, %c0_11], %24 {strides = array<i32>} : memref<16x192xbf16, #tpu.memory_space<vmem>>, vector<16x192xbf16>,
    return
  }
  func.func @transform_0(%arg0: i32, %arg1: i32) -> (i32, i32) {
    %c0_i32 = arith.constant 0 : i32
    %c0_i32_0 = arith.constant 0 : i32
    return %arg1, %c0_i32 : i32, i32
  }
  func.func @transform_1(%arg0: i32, %arg1: i32) -> (i32, i32) {
    %c0_i32 = arith.constant 0 : i32
    %c0_i32_0 = arith.constant 0 : i32
    return %c0_i32, %arg0 : i32, i32
  }
  func.func @transform_2(%arg0: i32, %arg1: i32) -> (i32, i32) {
    %c0_i32 = arith.constant 0 : i32
    %c0_i32_0 = arith.constant 0 : i32
    return %c0_i32, %arg0 : i32, i32
  }
  func.func @transform_3(%arg0: i32, %arg1: i32) -> (i32, i32) {
    %c0_i32 = arith.constant 0 : i32
    return %arg1, %arg0 : i32, i32
  }
}

module attributes {stable_mosaic.version = 11 : i64} {
  func.func @kernel(%arg0: i32, %arg1: i32, %arg2: memref<16x64xbf16, #tpu.memory_space<vmem>>, %arg3: memref<64x128xbf16, #tpu.memory_space<vmem>>, %arg4: memref<1x128xf32, #tpu.memory_space<vmem>>, %arg5: memref<16x128xf32, #tpu.memory_space<vmem>>) attributes {dimension_semantics = [#tpu.dimension_semantics<parallel>, #tpu.dimension_semantics<parallel>], iteration_bounds = array<i64: 1, 1>, scalar_prefetch = 0 : i64, scratch_operands = 0 : i64, tpu.core_type = #tpu.core_type<tc>, window_params = [{transform_indices = @transform_0, window_bounds = array<i64: 16, 64>}, {transform_indices = @transform_1, window_bounds = array<i64: 64, 128>}, {transform_indices = @transform_2, window_bounds = array<i64: 1, 128>}, {transform_indices = @transform_3, window_bounds = array<i64: 16, 128>}]} {
    %c0 = arith.constant 0 : index
    %c0_0 = arith.constant 0 : index
    %0 = vector.load %arg2[%c0, %c0_0] : memref<16x64xbf16, #tpu.memory_space<vmem>>, vector<16x64xbf16>
    %c0_1 = arith.constant 0 : index
    %c0_2 = arith.constant 0 : index
    %1 = vector.load %arg3[%c0_1, %c0_2] : memref<64x128xbf16, #tpu.memory_space<vmem>>, vector<64x128xbf16>
    %cst = arith.constant dense<0.000000e+00> : vector<16x128xf32>
    %2 = tpu.matmul %0, %1, %cst {dimension_numbers = #tpu.dot_dimension_numbers<[1], [0], [0], [1], [0, 0, 1, 1], [], []>} : vector<16x64xbf16>, vector<64x128xbf16>, vector<16x128xf32> -> vector<16x128xf32>
    %c0_3 = arith.constant 0 : index
    %c0_4 = arith.constant 0 : index
    %3 = vector.load %arg4[%c0_3, %c0_4] : memref<1x128xf32, #tpu.memory_space<vmem>>, vector<1x128xf32>
    %4 = vector.broadcast %3 : vector<1x128xf32> to vector<16x128xf32>
    %5 = arith.addf %2, %4 : vector<16x128xf32>
    %c0_5 = arith.constant 0 : index
    %c0_6 = arith.constant 0 : index
    %6 = vector.load %arg5[%c0_5, %c0_6] : memref<16x128xf32, #tpu.memory_space<vmem>>, vector<16x128xf32>
    tpu.vector_store %arg5[%c0_5, %c0_6], %5 {strides = array<i32>} : memref<16x128xf32, #tpu.memory_space<vmem>>, vector<16x128xf32>,
    return
  }
  func.func @transform_0(%arg0: i32, %arg1: i32) -> (i32, i32) {
    %c0_i32 = arith.constant 0 : i32
    %c0_i32_0 = arith.constant 0 : i32
    return %arg1, %c0_i32 : i32, i32
  }
  func.func @transform_1(%arg0: i32, %arg1: i32) -> (i32, i32) {
    %c0_i32 = arith.constant 0 : i32
    %c0_i32_0 = arith.constant 0 : i32
    return %c0_i32, %arg0 : i32, i32
  }
  func.func @transform_2(%arg0: i32, %arg1: i32) -> (i32, i32) {
    %c0_i32 = arith.constant 0 : i32
    %c0_i32_0 = arith.constant 0 : i32
    return %c0_i32, %arg0 : i32, i32
  }
  func.func @transform_3(%arg0: i32, %arg1: i32) -> (i32, i32) {
    %c0_i32 = arith.constant 0 : i32
    return %arg1, %arg0 : i32, i32
  }
}

</mosaic_0001>

<llo_original>
// kernel: _forward.12
$region0: #{_forward.12}
  #allocation0 [shape = 'u32[]', space=smem, size = 0x4, offset = 0x4, fixed_abs, tag = 'smem constant byte address 0x4 - core index']
  #allocation1 [shape = 'u32[72,128]{1,0:T(1,128)}', space=vmem, size = 0x9000, scoped, tag = 'internal scratch']
  %s0 = inlined_call_operand.vmem [shape: bf16[16,16], index: 0, kind: input, shape index: {}]
  %s1 = inlined_call_operand.vmem [shape: bf16[16,128], index: 1, kind: input, shape index: {}]
  %s2 = inlined_call_operand.vmem [shape: f32[1,128], index: 2, kind: input, shape index: {}]
  %s3 = inlined_call_operand.vmem [shape: bf16[16,128], index: 3, kind: output, shape index: {}]
  %s4 = sld [smem:[#allocation0]]
  $region22: #{_forward.12} parent=0
    _
  %s6 = ssub.s32 1, %s4
  %s7 = scalar_select 0, %s6, %s4
  // Predicated region
  $region2: #{_forward.12} parent=0 // pred_check
    _
  $region3: #{_forward.12} parent=0 // pred_check_branch
    %9 = sbr.rel (0) target = $region5
  $region4: #{_forward.12} parent=0 // pred_region
    _
  $region5: #{_forward.12} parent=0 // pred_fallthru
    _
  // Predicated region
  $region6: #{_forward.12} parent=0 // pred_check
    _
  $region7: #{_forward.12} parent=0 // pred_check_branch
    %11 = sbr.rel (0) target = $region9
  $region8: #{_forward.12} parent=0 // pred_region
    _
  $region9: #{_forward.12} parent=0 // pred_fallthru
    _
  // Predicated region
  $region10: #{_forward.12} parent=0 // pred_check
    _
  $region11: #{_forward.12} parent=0 // pred_check_branch
    %13 = sbr.rel (0) target = $region13
  $region12: #{_forward.12} parent=0 // pred_region
    _
  $region13: #{_forward.12} parent=0 // pred_fallthru
    _
  %v15 = vld [vmem:[%s0] sm:$0xf]
  %v16 = vld [vmem:[%s0 + $0x4] sm:$0xf]
  %v17 = vld [vmem:[%s1] sm:$0xf]
  %v18 = vld [vmem:[%s1 + $0x4] sm:$0xf]
  %v19 = vld [vmem:[%s2] sm:$0x1]
  %v21 = vperm.slane %v19, 0
  %v25 = vunpack.c.l.b16 %v15
  %v26 = vunpack.c.l.b16 %v16
  %v27 = vpack.c.b16 %v26, %v25
  %v30 = vunpack.c.l.b16 %v17
  %v31 = vunpack.c.l.b16 %v18
  %v32 = vpack.c.b16 %v31, %v30
  %vm34 = vcmask 130048
  %v36 = vsel %vm34, %v27, 0
  %38 = vmatpush.bf16.msra.mxu0 0
  %39 = vmatpush.bf16.msra.mxu0 0
  %40 = vmatpush.bf16.msra.mxu0 0
  %41 = vmatpush.bf16.msra.mxu0 0
  %42 = vmatpush.bf16.msra.mxu0 0
  %43 = vmatpush.bf16.msra.mxu0 0
  %44 = vmatpush.bf16.msra.mxu0 0
  %45 = vmatpush.bf16.msra.mxu0 %v32
  %46 = vmatmul.bf16.gmra.mxu0 %v36
  %v47 = vpop.f32.mrf.mxu0
  %v48 = vadd.f32 %v21, %v47
  %v49 = vpop.f32.mrf.mxu0
  %v50 = vadd.f32 %v21, %v49
  %51 = vdwg.mxu0
  %v52 = vpack.c.bf16 %v48, %v48
  %v53 = vpack.c.bf16 %v50, %v50
  %54 = vst [vmem:[%s3] sm:$0xf] %v52
  %55 = vst [vmem:[%s3 + $0x4] sm:$0xf] %v53
  // Predicated region
  $region14: #{_forward.12} parent=0 // pred_check
    _
  $region15: #{_forward.12} parent=0 // pred_check_branch
    %57 = sbr.rel (0) target = $region17
  $region16: #{_forward.12} parent=0 // pred_region
    _
  $region17: #{_forward.12} parent=0 // pred_fallthru
    _
  // Predicated region
  $region18: #{_forward.12} parent=0 // pred_check
    _
  $region19: #{_forward.12} parent=0 // pred_check_branch
    %59 = sbr.rel (0) target = $region21
  $region20: #{_forward.12} parent=0 // pred_region
    _
  $region21: #{_forward.12} parent=0 // pred_fallthru
    _

// kernel: _forward.13
$region0: #{_forward.13}
  #allocation0 [shape = 'u32[]', space=smem, size = 0x4, offset = 0x4, fixed_abs, tag = 'smem constant byte address 0x4 - core index']
  #allocation1 [shape = 'u32[72,128]{1,0:T(1,128)}', space=vmem, size = 0x9000, scoped, tag = 'internal scratch']
  %s0 = inlined_call_operand.vmem [shape: bf16[16,64], index: 0, kind: input, shape index: {}]
  %s1 = inlined_call_operand.hbm [shape: bf16[64,192], index: 1, kind: input, shape index: {}]
  %s2 = inlined_call_operand.vmem [shape: f32[1,192], index: 2, kind: input, shape index: {}]
  %s3 = inlined_call_operand.vmem [shape: bf16[16,192], index: 3, kind: output, shape index: {}]
  %s4 = sld [smem:[#allocation0]]
  $region26: #{_forward.13} parent=0
    _
  %s6 = ssub.s32 1, %s4
  %s7 = scalar_select 0, %s6, %s4
  $region1: #{_forward.13} parent=0
    #allocation2 [shape = 'u8[32768]{0}', space=vmem, size = 0x8000, scoped, tag = 'input window, operand 1, single buffered']
    #allocation3 [shape = 's32[1]{0}', space=sflag, size = 0x4, scoped, tag = 'scoped memory for _forward.13']
    %8 = vsyncpa [#allocation3], 0
    // Predicated region
    $region2: #{_forward.13} parent=1 // pred_check
      _
    $region3: #{_forward.13} parent=1 // pred_check_branch
      %10 = sbr.rel (0) target = $region5
    $region4: #{_forward.13} parent=1 // pred_region
      _
    $region5: #{_forward.13} parent=1 // pred_fallthru
      _
    // Predicated region
    $region6: #{_forward.13} parent=1 // pred_check
      _
    $region7: #{_forward.13} parent=1 // pred_check_branch
      %12 = sbr.rel (0) target = $region9
    $region8: #{_forward.13} parent=1 // pred_region
      %14 = vsyncadd [#allocation3], 0
      %s15 = sshll.u32 %s1, 4
      %s16 = int_to_ptr.hbm [resolvable:$true] %s15
      %s17 = sshll.u32 [#allocation2], 4
      %s18 = int_to_ptr.vmem [resolvable:$true] %s17
      %23 = dma.hbm_to_vmem [thread:$0]  %s16, 1024, %s18, [#allocation3], 128, 128, 8
    $region9: #{_forward.13} parent=1 // pred_fallthru
      _
    // Predicated region
    $region10: #{_forward.13} parent=1 // pred_check
      _
    $region11: #{_forward.13} parent=1 // pred_check_branch
      %25 = sbr.rel (0) target = $region13
    $region12: #{_forward.13} parent=1 // pred_region
      _
    $region13: #{_forward.13} parent=1 // pred_fallthru
      _
    // Predicated region
    $region14: #{_forward.13} parent=1 // pred_check
      _
    $region15: #{_forward.13} parent=1 // pred_check_branch
      %27 = sbr.rel (0) target = $region17
    $region16: #{_forward.13} parent=1 // pred_region
      %29 = dma.done [#allocation3], 1024
    $region17: #{_forward.13} parent=1 // pred_fallthru
      _
    %v31 = vld [vmem:[%s0] sm:$0xf]
    %v32 = vld [vmem:[%s0 + $0x4] sm:$0xf]
    %v33 = vunpack.c.l.bf16 %v31
    %v34 = vunpack.c.l.bf16 %v32
    %vm35 = vcmask 523264
    %v36 = vsel %vm35, %v33, 0.0
    %37 = vadd.xlane.f32.xlu0 %v36
    %v38 = vpop.xlane.xlu0 %37
    %v39 = vsel %vm35, %v34, 0.0
    %40 = vadd.xlane.f32.xlu0 %v39
    %v41 = vpop.xlane.xlu0 %40
    %v42 = vrcp.pop 64.0
    %v43 = vmul.f32 64.0, %v42
    %v44 = vsub.f32 1.0, %v43
    %v45 = vmul.f32 %v42, %v44
    %v46 = vadd.f32 %v42, %v45
    %vm47 = vweird.f32 %v42
    %v48 = vsel %vm47, %v42, %v46
    %v49 = vmul.f32 %v38, %v48
    %v50 = vmul.f32 %v41, %v48
    %v51 = vsub.f32 %v33, %v49
    %v52 = vsub.f32 %v34, %v50
    %v53 = vmul.f32 %v51, %v51
    %v54 = vmul.f32 %v52, %v52
    %v55 = vsel %vm35, %v53, 0.0
    %56 = vadd.xlane.f32.xlu0 %v55
    %v57 = vpop.xlane.xlu0 %56
    %v58 = vsel %vm35, %v54, 0.0
    %59 = vadd.xlane.f32.xlu0 %v58
    %v60 = vpop.xlane.xlu0 %59
    %v61 = vmul.f32 %v57, %v48
    %v62 = vmul.f32 %v60, %v48
    %v63 = vadd.f32 %v61, 1e-05
    %v64 = vadd.f32 %v62, 1e-05
    %v65 = vrsqrt.pop %v63
    %v66 = vmul.f32 %v65, %v63
    %v67 = vmul.f32 %v66, %v65
    %v68 = vmul.f32 0.5, %v67
    %v69 = vsub.f32 1.5, %v68
    %v70 = vmul.f32 %v65, %v69
    %vm71 = vweird.f32 %v63
    %vm72 = vweird.f32 %v65
    %vm73 = vmor %vm71, %vm72
    %v74 = vsel %vm73, %v65, %v70
    %v75 = vrsqrt.pop %v64
    %v76 = vmul.f32 %v75, %v64
    %v77 = vmul.f32 %v76, %v75
    %v78 = vmul.f32 0.5, %v77
    %v79 = vsub.f32 1.5, %v78
    %v80 = vmul.f32 %v75, %v79
    %vm81 = vweird.f32 %v64
    %vm82 = vweird.f32 %v75
    %vm83 = vmor %vm81, %vm82
    %v84 = vsel %vm83, %v75, %v80
    %v85 = vmul.f32 %v51, %v74
    %v86 = vmul.f32 %v52, %v84
    %v87 = vpack.c.bf16 %v86, %v85
    %v88 = vld [vmem:[#allocation2] sm:$0xff]
    %v89 = vld [vmem:[#allocation2 + $0x8] sm:$0xff]
    %v90 = vld [vmem:[#allocation2 + $0x10] sm:$0xff]
    %v91 = vld [vmem:[#allocation2 + $0x18] sm:$0xff]
    %v92 = vld [vmem:[#allocation2 + $0x20] sm:$0xff]
    %v93 = vld [vmem:[#allocation2 + $0x28] sm:$0xff]
    %v94 = vld [vmem:[#allocation2 + $0x30] sm:$0xff]
    %v95 = vld [vmem:[#allocation2 + $0x38] sm:$0xff]
    %v96 = vld [vmem:[%s2] sm:$0x3]
    %v98 = vperm.slane %v96, 0
    %v99 = vperm.slane %v96, 1
    %v110 = vunpack.c.l.b16 %v88
    %v111 = vunpack.c.h.b16 %v88
    %v112 = vunpack.c.l.b16 %v89
    %v113 = vunpack.c.h.b16 %v89
    %v114 = vunpack.c.l.b16 %v90
    %v115 = vunpack.c.h.b16 %v90
    %v116 = vunpack.c.l.b16 %v91
    %v117 = vunpack.c.h.b16 %v91
    %v118 = vunpack.c.l.b16 %v92
    %v119 = vunpack.c.h.b16 %v92
    %v120 = vunpack.c.l.b16 %v93
    %v121 = vunpack.c.h.b16 %v93
    %v122 = vunpack.c.l.b16 %v94
    %v123 = vunpack.c.h.b16 %v94
    %v124 = vunpack.c.l.b16 %v95
    %v125 = vunpack.c.h.b16 %v95
    %v126 = vpack.c.b16 %v112, %v110
    %v127 = vpack.c.b16 %v113, %v111
    %v128 = vpack.c.b16 %v116, %v114
    %v129 = vpack.c.b16 %v117, %v115
    %v130 = vpack.c.b16 %v120, %v118
    %v131 = vpack.c.b16 %v121, %v119
    %v132 = vpack.c.b16 %v124, %v122
    %v133 = vpack.c.b16 %v125, %v123
    %v143 = vsel %vm35, %v87, 0
    %145 = vmatpush.bf16.msra.mxu0 0
    %146 = vmatpush.bf16.msra.mxu0 0
    %147 = vmatpush.bf16.msra.mxu0 0
    %148 = vmatpush.bf16.msra.mxu0 0
    %149 = vmatpush.bf16.msra.mxu0 %v132
    %150 = vmatpush.bf16.msra.mxu0 %v130
    %151 = vmatpush.bf16.msra.mxu0 %v128
    %152 = vmatpush.bf16.msra.mxu0 %v126
    %153 = vmatmul.bf16.gmra.mxu0 %v143
    %v154 = vpop.f32.mrf.mxu0
    %v155 = vadd.f32 %v98, %v154
    %v156 = vpop.f32.mrf.mxu0
    %v157 = vadd.f32 %v98, %v156
    %158 = vdwg.mxu0
    %159 = vmatpush.bf16.msra.mxu0 0
    %160 = vmatpush.bf16.msra.mxu0 0
    %161 = vmatpush.bf16.msra.mxu0 0
    %162 = vmatpush.bf16.msra.mxu0 0
    %163 = vmatpush.bf16.msra.mxu0 %v133
    %164 = vmatpush.bf16.msra.mxu0 %v131
    %165 = vmatpush.bf16.msra.mxu0 %v129
    %166 = vmatpush.bf16.msra.mxu0 %v127
    %167 = vmatmul.bf16.gmra.mxu0 %v143
    %v168 = vpop.f32.mrf.mxu0
    %v169 = vadd.f32 %v99, %v168
    %v170 = vpop.f32.mrf.mxu0
    %v171 = vadd.f32 %v99, %v170
    %172 = vdwg.mxu0
    %v173 = vpack.c.bf16 %v169, %v155
    %v174 = vpack.c.bf16 %v171, %v157
    %vm175 = vcmask 1043456
    %vm176 = vcmask 523268
    %vm177 = vmor %vm176, %vm175
    %178 = vst.msk [vmem:[%s3] sm:$0xff] %vm177, %v173
    %179 = vst.msk [vmem:[%s3 + $0x8] sm:$0xff] %vm177, %v174
    // Predicated region
    $region18: #{_forward.13} parent=1 // pred_check
      _
    $region19: #{_forward.13} parent=1 // pred_check_branch
      %181 = sbr.rel (0) target = $region21
    $region20: #{_forward.13} parent=1 // pred_region
      _
    $region21: #{_forward.13} parent=1 // pred_fallthru
      _
    // Predicated region
    $region22: #{_forward.13} parent=1 // pred_check
      _
    $region23: #{_forward.13} parent=1 // pred_check_branch
      %183 = sbr.rel (0) target = $region25
    $region24: #{_forward.13} parent=1 // pred_region
      _
    $region25: #{_forward.13} parent=1 // pred_fallthru
      _
    %184 = vsyncpa [#allocation3], 1

// kernel: _forward.15
$region0: #{_forward.15}
  #allocation0 [shape = 'u32[]', space=smem, size = 0x4, offset = 0x4, fixed_abs, tag = 'smem constant byte address 0x4 - core index']
  #allocation1 [shape = 'u32[72,128]{1,0:T(1,128)}', space=vmem, size = 0x9000, scoped, tag = 'internal scratch']
  %s0 = inlined_call_operand.vmem [shape: bf16[16,64], index: 0, kind: input, shape index: {}]
  %s1 = inlined_call_operand.vmem [shape: bf16[64,64], index: 1, kind: input, shape index: {}]
  %s2 = inlined_call_operand.vmem [shape: f32[1,64], index: 2, kind: input, shape index: {}]
  %s3 = inlined_call_operand.vmem [shape: bf16[16,64], index: 3, kind: input, shape index: {}]
  %s4 = inlined_call_operand.vmem [shape: bf16[16,64], index: 4, kind: output, shape index: {}]
  %s5 = sld [smem:[#allocation0]]
  $region26: #{_forward.15} parent=0
    _
  %s7 = ssub.s32 1, %s5
  %s8 = scalar_select 0, %s7, %s5
  // Predicated region
  $region2: #{_forward.15} parent=0 // pred_check
    _
  $region3: #{_forward.15} parent=0 // pred_check_branch
    %10 = sbr.rel (0) target = $region5
  $region4: #{_forward.15} parent=0 // pred_region
    _
  $region5: #{_forward.15} parent=0 // pred_fallthru
    _
  // Predicated region
  $region6: #{_forward.15} parent=0 // pred_check
    _
  $region7: #{_forward.15} parent=0 // pred_check_branch
    %12 = sbr.rel (0) target = $region9
  $region8: #{_forward.15} parent=0 // pred_region
    _
  $region9: #{_forward.15} parent=0 // pred_fallthru
    _
  // Predicated region
  $region10: #{_forward.15} parent=0 // pred_check
    _
  $region11: #{_forward.15} parent=0 // pred_check_branch
    %14 = sbr.rel (0) target = $region13
  $region12: #{_forward.15} parent=0 // pred_region
    _
  $region13: #{_forward.15} parent=0 // pred_fallthru
    _
  // Predicated region
  $region14: #{_forward.15} parent=0 // pred_check
    _
  $region15: #{_forward.15} parent=0 // pred_check_branch
    %16 = sbr.rel (0) target = $region17
  $region16: #{_forward.15} parent=0 // pred_region
    _
  $region17: #{_forward.15} parent=0 // pred_fallthru
    _
  %v18 = vld [vmem:[%s0] sm:$0xf]
  %v19 = vld [vmem:[%s0 + $0x4] sm:$0xf]
  %v20 = vld [vmem:[%s1] sm:$0xf]
  %v21 = vld [vmem:[%s1 + $0x4] sm:$0xf]
  %v22 = vld [vmem:[%s1 + $0x8] sm:$0xf]
  %v23 = vld [vmem:[%s1 + $0xc] sm:$0xf]
  %v24 = vld [vmem:[%s1 + $0x10] sm:$0xf]
  %v25 = vld [vmem:[%s1 + $0x14] sm:$0xf]
  %v26 = vld [vmem:[%s1 + $0x18] sm:$0xf]
  %v27 = vld [vmem:[%s1 + $0x1c] sm:$0xf]
  %v28 = vld [vmem:[%s2] sm:$0x1]
  %v30 = vperm.slane %v28, 0
  %v34 = vunpack.c.l.b16 %v18
  %v35 = vunpack.c.l.b16 %v19
  %v36 = vpack.c.b16 %v35, %v34
  %v45 = vunpack.c.l.b16 %v20
  %v46 = vunpack.c.l.b16 %v21
  %v47 = vunpack.c.l.b16 %v22
  %v48 = vunpack.c.l.b16 %v23
  %v49 = vunpack.c.l.b16 %v24
  %v50 = vunpack.c.l.b16 %v25
  %v51 = vunpack.c.l.b16 %v26
  %v52 = vunpack.c.l.b16 %v27
  %v53 = vpack.c.b16 %v46, %v45
  %v54 = vpack.c.b16 %v48, %v47
  %v55 = vpack.c.b16 %v50, %v49
  %v56 = vpack.c.b16 %v52, %v51
  %vm61 = vcmask 523264
  %v63 = vsel %vm61, %v36, 0
  %65 = vmatpush.bf16.msra.mxu0 0
  %66 = vmatpush.bf16.msra.mxu0 0
  %67 = vmatpush.bf16.msra.mxu0 0
  %68 = vmatpush.bf16.msra.mxu0 0
  %69 = vmatpush.bf16.msra.mxu0 %v56
  %70 = vmatpush.bf16.msra.mxu0 %v55
  %71 = vmatpush.bf16.msra.mxu0 %v54
  %72 = vmatpush.bf16.msra.mxu0 %v53
  %73 = vmatmul.bf16.gmra.mxu0 %v63
  %v74 = vpop.f32.mrf.mxu0
  %v75 = vadd.f32 %v30, %v74
  %v76 = vpop.f32.mrf.mxu0
  %v77 = vadd.f32 %v30, %v76
  %78 = vdwg.mxu0
  %v79 = vld [vmem:[%s3] sm:$0xf]
  %v80 = vld [vmem:[%s3 + $0x4] sm:$0xf]
  %v81 = vunpack.c.l.bf16 %v79
  %v82 = vunpack.c.l.bf16 %v80
  %v83 = vadd.f32 %v75, %v81
  %v84 = vadd.f32 %v77, %v82
  %v85 = vpack.c.bf16 %v83, %v83
  %v86 = vpack.c.bf16 %v84, %v84
  %vm87 = vcmask 519168
  %88 = vst.msk [vmem:[%s4] sm:$0xf] %vm87, %v85
  %89 = vst.msk [vmem:[%s4 + $0x4] sm:$0xf] %vm87, %v86
  // Predicated region
  $region18: #{_forward.15} parent=0 // pred_check
    _
  $region19: #{_forward.15} parent=0 // pred_check_branch
    %91 = sbr.rel (0) target = $region21
  $region20: #{_forward.15} parent=0 // pred_region
    _
  $region21: #{_forward.15} parent=0 // pred_fallthru
    _
  // Predicated region
  $region22: #{_forward.15} parent=0 // pred_check
    _
  $region23: #{_forward.15} parent=0 // pred_check_branch
    %93 = sbr.rel (0) target = $region25
  $region24: #{_forward.15} parent=0 // pred_region
    _
  $region25: #{_forward.15} parent=0 // pred_fallthru
    _

// kernel: _forward.14
$region0: #{_forward.14}
  #allocation0 [shape = 'u32[]', space=smem, size = 0x4, offset = 0x4, fixed_abs, tag = 'smem constant byte address 0x4 - core index']
  #allocation1 [shape = 'u32[72,128]{1,0:T(1,128)}', space=vmem, size = 0x9000, scoped, tag = 'internal scratch']
  #allocation2 [shape = 'f32[8,8,1]{2,1,0:T(8,128)}', space=vmem, size = 0x8000, scoped, tag = 'scratch operand']
  #allocation3 [shape = 'f32[8,8,1]{2,1,0:T(8,128)}', space=vmem, size = 0x8000, scoped, tag = 'scratch operand']
  #allocation4 [shape = 'f32[8,8,8]{2,1,0:T(8,128)}', space=vmem, size = 0x8000, scoped, tag = 'scratch operand']
  %s0 = inlined_call_operand.vmem [shape: bf16[2,8,8,8], index: 0, kind: input, shape index: {}]
  %s1 = inlined_call_operand.vmem [shape: bf16[2,8,8,8], index: 1, kind: input, shape index: {}]
  %s2 = inlined_call_operand.vmem [shape: bf16[2,8,8,8], index: 2, kind: input, shape index: {}]
  %s3 = inlined_call_operand.vmem [shape: bf16[2,8,8,8], index: 3, kind: output, shape index: {}]
  %s4 = sld [smem:[#allocation0]]
  $region53: #{_forward.14} parent=0
    _
  %s6 = ssub.s32 1, %s4
  %s7 = scalar_select 0, %s6, %s4
  loop: start=0, step=1, limit=4
  $region2: #{_forward.14} parent=0 // loop_pre_header
    _
  $region3: #{_forward.14} parent=0 // loop_header
    %s9 = sphi 0, %s13
    %p10 = scmp.ge.s32.totalorder %s9, 4
    %s16 = sphi 0, %s35
    %s17 = sphi 0, %s31
    %s18 = sphi 0, %s27
    %s19 = sphi 0, %s16
    %s20 = sphi 0, %s17
    %s21 = sphi 0, %s18
    %s22 = sphi 0, %s19
    %s23 = sphi 0, %s20
    %s24 = sphi 0, %s21
    %s40 = sphi 0, %s42
    %s43 = sphi 0, %s40
    %s44 = sphi 0, %s43
    %s60 = sphi 0, %s44
    %s68 = sphi 0, %s70
    %s71 = sphi 0, %s68
    %s72 = sphi 0, %s71
    %s88 = sphi 0, %s72
    %s96 = sphi 0, %s98
    %s99 = sphi 0, %s96
    %s100 = sphi 0, %s99
    %s116 = sphi 0, %s100
    %s124 = sphi 0, %s126
    %s127 = sphi 0, %s124
    %s128 = sphi 0, %s127
    %s144 = sphi 0, %s128
  $region4: #{_forward.14} parent=0 // loop_header_branch
    %12 = sbr.rel (%p10) target = $region8
  $region5: #{_forward.14} parent=0 // loop_body
    %s14 = ssub.s32 %s9, 1
    %s15 = ssub.s32 %s9, 2
    %s25 = sadd.s32 1, %s18
    %p26 = scmp.ge.s32.totalorder %s25, 1
    %s27 = scalar_select %p26, 0, %s25
    %s28 = sadd.s32 1, %s17
    %s29 = scalar_select %p26, %s28, %s17
    %p30 = scmp.ge.s32.totalorder %s29, 1
    %s31 = scalar_select %p30, 0, %s29
    %s32 = sadd.s32 1, %s16
    %s33 = scalar_select %p30, %s32, %s16
    %p34 = scmp.ge.s32.totalorder %s33, 2
    %s35 = scalar_select %p34, 0, %s33
    %s36 = ssub.s32 %s16, %s35
    %s37 = ssub.s32 %s17, %s31
    %s38 = sor.u32 %s36, %s37
    %p39 = scmp.eq.s32.totalorder %s38, 0
    %s41 = sadd.s32 %s40, 1
    %s42 = scalar_select %p39, %s40, %s41
    %p45 = pneg %p39
    %p46 = scmp.eq.s32.totalorder %s9, 1
    %p47 = por %p45, %p46
    %p48 = scmp.ne.s32.totalorder %s40, %s43
    %p49 = scmp.eq.s32.totalorder %s9, 0
    %p50 = por %p48, %p49
    %p51 = scmp.ne.s32.totalorder %s40, %s43
    %p52 = scmp.eq.s32.totalorder %s14, 1
    %p53 = por %p51, %p52
    %p54 = scmp.ne.s32.totalorder %s43, %s44
    %p55 = scmp.eq.s32.totalorder %s14, 0
    %p56 = por %p54, %p55
    %p57 = scmp.ne.s32.totalorder %s43, %s44
    %p58 = scmp.eq.s32.totalorder %s15, 1
    %p59 = por %p57, %p58
    %p61 = scmp.ne.s32.totalorder %s44, %s60
    %p62 = scmp.eq.s32.totalorder %s15, 0
    %p63 = por %p61, %p62
    %s64 = ssub.s32 %s16, %s35
    %s65 = ssub.s32 %s18, %s27
    %s66 = sor.u32 %s64, %s65
    %p67 = scmp.eq.s32.totalorder %s66, 0
    %s69 = sadd.s32 %s68, 1
    %s70 = scalar_select %p67, %s68, %s69
    %p73 = pneg %p67
    %p74 = scmp.eq.s32.totalorder %s9, 1
    %p75 = por %p73, %p74
    %p76 = scmp.ne.s32.totalorder %s68, %s71
    %p77 = scmp.eq.s32.totalorder %s9, 0
    %p78 = por %p76, %p77
    %p79 = scmp.ne.s32.totalorder %s68, %s71
    %p80 = scmp.eq.s32.totalorder %s14, 1
    %p81 = por %p79, %p80
    %p82 = scmp.ne.s32.totalorder %s71, %s72
    %p83 = scmp.eq.s32.totalorder %s14, 0
    %p84 = por %p82, %p83
    %p85 = scmp.ne.s32.totalorder %s71, %s72
    %p86 = scmp.eq.s32.totalorder %s15, 1
    %p87 = por %p85, %p86
    %p89 = scmp.ne.s32.totalorder %s72, %s88
    %p90 = scmp.eq.s32.totalorder %s15, 0
    %p91 = por %p89, %p90
    %s92 = ssub.s32 %s16, %s35
    %s93 = ssub.s32 %s18, %s27
    %s94 = sor.u32 %s92, %s93
    %p95 = scmp.eq.s32.totalorder %s94, 0
    %s97 = sadd.s32 %s96, 1
    %s98 = scalar_select %p95, %s96, %s97
    %p101 = pneg %p95
    %p102 = scmp.eq.s32.totalorder %s9, 1
    %p103 = por %p101, %p102
    %p104 = scmp.ne.s32.totalorder %s96, %s99
    %p105 = scmp.eq.s32.totalorder %s9, 0
    %p106 = por %p104, %p105
    %p107 = scmp.ne.s32.totalorder %s96, %s99
    %p108 = scmp.eq.s32.totalorder %s14, 1
    %p109 = por %p107, %p108
    %p110 = scmp.ne.s32.totalorder %s99, %s100
    %p111 = scmp.eq.s32.totalorder %s14, 0
    %p112 = por %p110, %p111
    %p113 = scmp.ne.s32.totalorder %s99, %s100
    %p114 = scmp.eq.s32.totalorder %s15, 1
    %p115 = por %p113, %p114
    %p117 = scmp.ne.s32.totalorder %s100, %s116
    %p118 = scmp.eq.s32.totalorder %s15, 0
    %p119 = por %p117, %p118
    %s120 = ssub.s32 %s16, %s35
    %s121 = ssub.s32 %s17, %s31
    %s122 = sor.u32 %s120, %s121
    %p123 = scmp.eq.s32.totalorder %s122, 0
    %s125 = sadd.s32 %s124, 1
    %s126 = scalar_select %p123, %s124, %s125
    %p129 = pneg %p123
    %p130 = scmp.eq.s32.totalorder %s9, 1
    %p131 = por %p129, %p130
    %p132 = scmp.ne.s32.totalorder %s124, %s127
    %p133 = scmp.eq.s32.totalorder %s9, 0
    %p134 = por %p132, %p133
    %p135 = scmp.ne.s32.totalorder %s124, %s127
    %p136 = scmp.eq.s32.totalorder %s14, 1
    %p137 = por %p135, %p136
    %p138 = scmp.ne.s32.totalorder %s127, %s128
    %p139 = scmp.eq.s32.totalorder %s14, 0
    %p140 = por %p138, %p139
    %p141 = scmp.ne.s32.totalorder %s127, %s128
    %p142 = scmp.eq.s32.totalorder %s15, 1
    %p143 = por %p141, %p142
    %p145 = scmp.ne.s32.totalorder %s128, %s144
    %p146 = scmp.eq.s32.totalorder %s15, 0
    %p147 = por %p145, %p146
    %p148 = scmp.le.s32.totalorder 1, %s9
    %p149 = scmp.lt.s32.totalorder %s9, 3
    %p150 = pnand %p148, %p149
    %p151 = pneg %p150
    // Predicated region
    $region9: #{_forward.14} parent=5 // pred_check
      _
    $region10: #{_forward.14} parent=5 // pred_check_branch
      %153 = sbr.rel (%p150) target = $region12
    $region11: #{_forward.14} parent=5 // pred_region
      %s154 = ssub.s32 %s9, 1
    $region12: #{_forward.14} parent=5 // pred_fallthru
      _
    %p155 = scmp.lt.s32.totalorder %s9, 2
    // Predicated region
    $region13: #{_forward.14} parent=5 // pred_check
      %p156 = pneg %p155
    $region14: #{_forward.14} parent=5 // pred_check_branch
      %158 = sbr.rel (%p156) target = $region16
    $region15: #{_forward.14} parent=5 // pred_region
      // Predicated region
      $region17: #{_forward.14} parent=15 // pred_check
        %p159 = pneg %p50
      $region18: #{_forward.14} parent=15 // pred_check_branch
        %161 = sbr.rel (%p159) target = $region20
      $region19: #{_forward.14} parent=15 // pred_region
        %p162 = scmp.lt.s32.totalorder %s16, 1
        %s163 = scalar_select %p162, %s16, 1
        %p164 = scmp.lt.s32.totalorder %s17, 0
        %s165 = scalar_select %p164, %s17, 0
        %s166 = smul.addr %s163, 8
        %s167 = sadd.s32 %s165, %s166
        %s168 = smul.addr %s167, 4
        %s169 = scalar_lea.vmem %s0, %s168
      $region20: #{_forward.14} parent=15 // pred_fallthru
        _
      // Predicated region
      $region21: #{_forward.14} parent=15 // pred_check
        %p170 = pneg %p78
      $region22: #{_forward.14} parent=15 // pred_check_branch
        %172 = sbr.rel (%p170) target = $region24
      $region23: #{_forward.14} parent=15 // pred_region
        %p173 = scmp.lt.s32.totalorder %s16, 1
        %s174 = scalar_select %p173, %s16, 1
        %p175 = scmp.lt.s32.totalorder %s18, 0
        %s176 = scalar_select %p175, %s18, 0
        %s177 = smul.addr %s174, 8
        %s178 = sadd.s32 %s176, %s177
        %s179 = smul.addr %s178, 4
        %s180 = scalar_lea.vmem %s1, %s179
      $region24: #{_forward.14} parent=15 // pred_fallthru
        _
      // Predicated region
      $region25: #{_forward.14} parent=15 // pred_check
        %p181 = pneg %p106
      $region26: #{_forward.14} parent=15 // pred_check_branch
        %183 = sbr.rel (%p181) target = $region28
      $region27: #{_forward.14} parent=15 // pred_region
        %p184 = scmp.lt.s32.totalorder %s16, 1
        %s185 = scalar_select %p184, %s16, 1
        %p186 = scmp.lt.s32.totalorder %s18, 0
        %s187 = scalar_select %p186, %s18, 0
        %s188 = smul.addr %s185, 8
        %s189 = sadd.s32 %s187, %s188
        %s190 = smul.addr %s189, 4
        %s191 = scalar_lea.vmem %s2, %s190
      $region28: #{_forward.14} parent=15 // pred_fallthru
        _
    $region16: #{_forward.14} parent=5 // pred_fallthru
      _
    %p192 = scmp.le.s32.totalorder 1, %s9
    %p193 = scmp.lt.s32.totalorder %s9, 3
    %p194 = pnand %p192, %p193
    %p195 = pneg %p194
    // Predicated region
    $region29: #{_forward.14} parent=5 // pred_check
      _
    $region30: #{_forward.14} parent=5 // pred_check_branch
      %197 = sbr.rel (%p194) target = $region32
    $region31: #{_forward.14} parent=5 // pred_region
      %s198 = ssub.s32 %s9, 1
      %p199 = scmp.lt.s32.totalorder %s19, 1
      %s200 = scalar_select %p199, %s19, 1
      %p201 = scmp.lt.s32.totalorder %s20, 0
      %s202 = scalar_select %p201, %s20, 0
      %s203 = smul.addr %s200, 8
      %s204 = sadd.s32 %s202, %s203
      %s205 = smul.addr %s204, 4
      %s206 = scalar_lea.vmem %s0, %s205
      %p207 = pneg %p56
      %p208 = pneg %p53
      %p209 = scmp.lt.s32.totalorder %s19, 1
      %s210 = scalar_select %p209, %s19, 1
      %p211 = scmp.lt.s32.totalorder %s21, 0
      %s212 = scalar_select %p211, %s21, 0
      %s213 = smul.addr %s210, 8
      %s214 = sadd.s32 %s212, %s213
      %s215 = smul.addr %s214, 4
      %s216 = scalar_lea.vmem %s1, %s215
      %p217 = pneg %p84
      %p218 = pneg %p81
      %p219 = scmp.lt.s32.totalorder %s19, 1
      %s220 = scalar_select %p219, %s19, 1
      %p221 = scmp.lt.s32.totalorder %s21, 0
      %s222 = scalar_select %p221, %s21, 0
      %s223 = smul.addr %s220, 8
      %s224 = sadd.s32 %s222, %s223
      %s225 = smul.addr %s224, 4
      %s226 = scalar_lea.vmem %s2, %s225
      %p227 = pneg %p112
      %p228 = pneg %p109
      %p229 = pneg %p140
      %p230 = pneg %p137
      %p231 = scmp.lt.s32.totalorder %s19, 1
      %s232 = scalar_select %p231, %s19, 1
      %p233 = scmp.lt.s32.totalorder %s20, 0
      %s234 = scalar_select %p233, %s20, 0
      %s235 = smul.addr %s232, 8
      %s236 = sadd.s32 %s234, %s235
      %s237 = smul.addr %s236, 4
      %s238 = scalar_lea.vmem %s3, %s237
      %p239 = scmp.lt.s32.totalorder %s19, 1
      %s240 = scalar_select %p239, %s19, 1
      %p241 = scmp.lt.s32.totalorder %s20, 0
      %s242 = scalar_select %p241, %s20, 0
      %s243 = smul.addr %s240, 8
      %s244 = sadd.s32 %s242, %s243
      %s245 = smul.addr %s244, 4
      %s246 = scalar_lea.vmem %s0, %s245
      %p247 = scmp.lt.s32.totalorder %s19, 1
      %s248 = scalar_select %p247, %s19, 1
      %p249 = scmp.lt.s32.totalorder %s21, 0
      %s250 = scalar_select %p249, %s21, 0
      %s251 = smul.addr %s248, 8
      %s252 = sadd.s32 %s250, %s251
      %s253 = smul.addr %s252, 4
      %s254 = scalar_lea.vmem %s1, %s253
      %p255 = scmp.lt.s32.totalorder %s19, 1
      %s256 = scalar_select %p255, %s19, 1
      %p257 = scmp.lt.s32.totalorder %s21, 0
      %s258 = scalar_select %p257, %s21, 0
      %s259 = smul.addr %s256, 8
      %s260 = sadd.s32 %s258, %s259
      %s261 = smul.addr %s260, 4
      %s262 = scalar_lea.vmem %s2, %s261
      %p263 = scmp.lt.s32.totalorder %s19, 1
      %s264 = scalar_select %p263, %s19, 1
      %p265 = scmp.lt.s32.totalorder %s20, 0
      %s266 = scalar_select %p265, %s20, 0
      %s267 = smul.addr %s264, 8
      %s268 = sadd.s32 %s266, %s267
      %s269 = smul.addr %s268, 4
      %s270 = scalar_lea.vmem %s3, %s269
      %p272 = scmp.eq.s32.totalorder %s21, 0
      // Predicated region
      $region33: #{_forward.14} parent=31 // pred_check
        %p273 = pneg %p272
      $region34: #{_forward.14} parent=31 // pred_check_branch
        %275 = sbr.rel (%p273) target = $region36
      $region35: #{_forward.14} parent=31 // pred_region
        %vm276 = vcmask 7168
        %277 = vst.msk [vmem:[#allocation2] sm:$0xff] %vm276, -1e+30
        %278 = vst.msk [vmem:[#allocation2 + $0x8] sm:$0xff] %vm276, -1e+30
        %279 = vst.msk [vmem:[#allocation2 + $0x10] sm:$0xff] %vm276, -1e+30
        %280 = vst.msk [vmem:[#allocation2 + $0x18] sm:$0xff] %vm276, -1e+30
        %281 = vst.msk [vmem:[#allocation2 + $0x20] sm:$0xff] %vm276, -1e+30
        %282 = vst.msk [vmem:[#allocation2 + $0x28] sm:$0xff] %vm276, -1e+30
        %283 = vst.msk [vmem:[#allocation2 + $0x30] sm:$0xff] %vm276, -1e+30
        %284 = vst.msk [vmem:[#allocation2 + $0x38] sm:$0xff] %vm276, -1e+30
        %285 = vst.msk [vmem:[#allocation3] sm:$0xff] %vm276, 0.0
        %286 = vst.msk [vmem:[#allocation3 + $0x8] sm:$0xff] %vm276, 0.0
        %287 = vst.msk [vmem:[#allocation3 + $0x10] sm:$0xff] %vm276, 0.0
        %288 = vst.msk [vmem:[#allocation3 + $0x18] sm:$0xff] %vm276, 0.0
        %289 = vst.msk [vmem:[#allocation3 + $0x20] sm:$0xff] %vm276, 0.0
        %290 = vst.msk [vmem:[#allocation3 + $0x28] sm:$0xff] %vm276, 0.0
        %291 = vst.msk [vmem:[#allocation3 + $0x30] sm:$0xff] %vm276, 0.0
        %292 = vst.msk [vmem:[#allocation3 + $0x38] sm:$0xff] %vm276, 0.0
        %vm293 = vcmask 64512
        %294 = vst.msk [vmem:[#allocation4] sm:$0xff] %vm293, 0.0
        %295 = vst.msk [vmem:[#allocation4 + $0x8] sm:$0xff] %vm293, 0.0
        %296 = vst.msk [vmem:[#allocation4 + $0x10] sm:$0xff] %vm293, 0.0
        %297 = vst.msk [vmem:[#allocation4 + $0x18] sm:$0xff] %vm293, 0.0
        %298 = vst.msk [vmem:[#allocation4 + $0x20] sm:$0xff] %vm293, 0.0
        %299 = vst.msk [vmem:[#allocation4 + $0x28] sm:$0xff] %vm293, 0.0
        %300 = vst.msk [vmem:[#allocation4 + $0x30] sm:$0xff] %vm293, 0.0
        %301 = vst.msk [vmem:[#allocation4 + $0x38] sm:$0xff] %vm293, 0.0
      $region36: #{_forward.14} parent=31 // pred_fallthru
        _
      %v302 = vld [vmem:[%s246] sm:$0xf]
      %v303 = vld [vmem:[%s246 + $0x4] sm:$0xf]
      %v304 = vld [vmem:[%s246 + $0x8] sm:$0xf]
      %v305 = vld [vmem:[%s246 + $0xc] sm:$0xf]
      %v306 = vld [vmem:[%s246 + $0x10] sm:$0xf]
      %v307 = vld [vmem:[%s246 + $0x14] sm:$0xf]
      %v308 = vld [vmem:[%s246 + $0x18] sm:$0xf]
      %v309 = vld [vmem:[%s246 + $0x1c] sm:$0xf]
      %v310 = vld [vmem:[%s254] sm:$0xf]
      %v311 = vld [vmem:[%s254 + $0x4] sm:$0xf]
      %v312 = vld [vmem:[%s254 + $0x8] sm:$0xf]
      %v313 = vld [vmem:[%s254 + $0xc] sm:$0xf]
      %v314 = vld [vmem:[%s254 + $0x10] sm:$0xf]
      %v315 = vld [vmem:[%s254 + $0x14] sm:$0xf]
      %v316 = vld [vmem:[%s254 + $0x18] sm:$0xf]
      %v317 = vld [vmem:[%s254 + $0x1c] sm:$0xf]
      %v318 = vld [vmem:[%s262] sm:$0xf]
      %v319 = vld [vmem:[%s262 + $0x4] sm:$0xf]
      %v320 = vld [vmem:[%s262 + $0x8] sm:$0xf]
      %v321 = vld [vmem:[%s262 + $0xc] sm:$0xf]
      %v322 = vld [vmem:[%s262 + $0x10] sm:$0xf]
      %v323 = vld [vmem:[%s262 + $0x14] sm:$0xf]
      %v324 = vld [vmem:[%s262 + $0x18] sm:$0xf]
      %v325 = vld [vmem:[%s262 + $0x1c] sm:$0xf]
      %vm326 = vcmask 64512
      %v328 = vsel %vm326, %v302, 0
      %v331 = vsel %vm326, %v310, 0
      %333 = vmatpush.bf16.xpose.msra.mxu0 0
      %334 = vmatpush.bf16.xpose.msra.mxu0 0
      %335 = vmatpush.bf16.xpose.msra.mxu0 0
      %336 = vmatpush.bf16.xpose.msra.mxu0 0
      %337 = vmatpush.bf16.xpose.msra.mxu0 0
      %338 = vmatpush.bf16.xpose.msra.mxu0 0
      %339 = vmatpush.bf16.xpose.msra.mxu0 0
      %340 = vmatpush.bf16.xpose.msra.mxu0 %v331
      %341 = vmatmul.bf16.gmra.mxu0 %v328
      %v342 = vpop.f32.mrf.mxu0
      %v343 = vadd.f32 0.0, %v342
      %v344 = vpop.f32.mrf.mxu0
      %345 = vdwg.mxu0
      %v347 = vsel %vm326, %v303, 0
      %v350 = vsel %vm326, %v311, 0
      %352 = vmatpush.bf16.xpose.msra.mxu0 0
      %353 = vmatpush.bf16.xpose.msra.mxu0 0
      %354 = vmatpush.bf16.xpose.msra.mxu0 0
      %355 = vmatpush.bf16.xpose.msra.mxu0 0
      %356 = vmatpush.bf16.xpose.msra.mxu0 0
      %357 = vmatpush.bf16.xpose.msra.mxu0 0
      %358 = vmatpush.bf16.xpose.msra.mxu0 0
      %359 = vmatpush.bf16.xpose.msra.mxu0 %v350
      %360 = vmatmul.bf16.gmra.mxu0 %v347
      %v361 = vpop.f32.mrf.mxu0
      %v362 = vadd.f32 0.0, %v361
      %v363 = vpop.f32.mrf.mxu0
      %364 = vdwg.mxu0
      %v366 = vsel %vm326, %v304, 0
      %v369 = vsel %vm326, %v312, 0
      %371 = vmatpush.bf16.xpose.msra.mxu0 0
      %372 = vmatpush.bf16.xpose.msra.mxu0 0
      %373 = vmatpush.bf16.xpose.msra.mxu0 0
      %374 = vmatpush.bf16.xpose.msra.mxu0 0
      %375 = vmatpush.bf16.xpose.msra.mxu0 0
      %376 = vmatpush.bf16.xpose.msra.mxu0 0
      %377 = vmatpush.bf16.xpose.msra.mxu0 0
      %378 = vmatpush.bf16.xpose.msra.mxu0 %v369
      %379 = vmatmul.bf16.gmra.mxu0 %v366
      %v380 = vpop.f32.mrf.mxu0
      %v381 = vadd.f32 0.0, %v380
      %v382 = vpop.f32.mrf.mxu0
      %383 = vdwg.mxu0
      %v385 = vsel %vm326, %v305, 0
      %v388 = vsel %vm326, %v313, 0
      %390 = vmatpush.bf16.xpose.msra.mxu0 0
      %391 = vmatpush.bf16.xpose.msra.mxu0 0
      %392 = vmatpush.bf16.xpose.msra.mxu0 0
      %393 = vmatpush.bf16.xpose.msra.mxu0 0
      %394 = vmatpush.bf16.xpose.msra.mxu0 0
      %395 = vmatpush.bf16.xpose.msra.mxu0 0
      %396 = vmatpush.bf16.xpose.msra.mxu0 0
      %397 = vmatpush.bf16.xpose.msra.mxu0 %v388
      %398 = vmatmul.bf16.gmra.mxu0 %v385
      %v399 = vpop.f32.mrf.mxu0
      %v400 = vadd.f32 0.0, %v399
      %v401 = vpop.f32.mrf.mxu0
      %402 = vdwg.mxu0
      %v404 = vsel %vm326, %v306, 0
      %v407 = vsel %vm326, %v314, 0
      %409 = vmatpush.bf16.xpose.msra.mxu0 0
      %410 = vmatpush.bf16.xpose.msra.mxu0 0
      %411 = vmatpush.bf16.xpose.msra.mxu0 0
      %412 = vmatpush.bf16.xpose.msra.mxu0 0
      %413 = vmatpush.bf16.xpose.msra.mxu0 0
      %414 = vmatpush.bf16.xpose.msra.mxu0 0
      %415 = vmatpush.bf16.xpose.msra.mxu0 0
      %416 = vmatpush.bf16.xpose.msra.mxu0 %v407
      %417 = vmatmul.bf16.gmra.mxu0 %v404
      %v418 = vpop.f32.mrf.mxu0
      %v419 = vadd.f32 0.0, %v418
      %v420 = vpop.f32.mrf.mxu0
      %421 = vdwg.mxu0
      %v423 = vsel %vm326, %v307, 0
      %v426 = vsel %vm326, %v315, 0
      %428 = vmatpush.bf16.xpose.msra.mxu0 0
      %429 = vmatpush.bf16.xpose.msra.mxu0 0
      %430 = vmatpush.bf16.xpose.msra.mxu0 0
      %431 = vmatpush.bf16.xpose.msra.mxu0 0
      %432 = vmatpush.bf16.xpose.msra.mxu0 0
      %433 = vmatpush.bf16.xpose.msra.mxu0 0
      %434 = vmatpush.bf16.xpose.msra.mxu0 0
      %435 = vmatpush.bf16.xpose.msra.mxu0 %v426
      %436 = vmatmul.bf16.gmra.mxu0 %v423
      %v437 = vpop.f32.mrf.mxu0
      %v438 = vadd.f32 0.0, %v437
      %v439 = vpop.f32.mrf.mxu0
      %440 = vdwg.mxu0
      %v442 = vsel %vm326, %v308, 0
      %v445 = vsel %vm326, %v316, 0
      %447 = vmatpush.bf16.xpose.msra.mxu0 0
      %448 = vmatpush.bf16.xpose.msra.mxu0 0
      %449 = vmatpush.bf16.xpose.msra.mxu0 0
      %450 = vmatpush.bf16.xpose.msra.mxu0 0
      %451 = vmatpush.bf16.xpose.msra.mxu0 0
      %452 = vmatpush.bf16.xpose.msra.mxu0 0
      %453 = vmatpush.bf16.xpose.msra.mxu0 0
      %454 = vmatpush.bf16.xpose.msra.mxu0 %v445
      %455 = vmatmul.bf16.gmra.mxu0 %v442
      %v456 = vpop.f32.mrf.mxu0
      %v457 = vadd.f32 0.0, %v456
      %v458 = vpop.f32.mrf.mxu0
      %459 = vdwg.mxu0
      %v461 = vsel %vm326, %v309, 0
      %v464 = vsel %vm326, %v317, 0
      %466 = vmatpush.bf16.xpose.msra.mxu0 0
      %467 = vmatpush.bf16.xpose.msra.mxu0 0
      %468 = vmatpush.bf16.xpose.msra.mxu0 0
      %469 = vmatpush.bf16.xpose.msra.mxu0 0
      %470 = vmatpush.bf16.xpose.msra.mxu0 0
      %471 = vmatpush.bf16.xpose.msra.mxu0 0
      %472 = vmatpush.bf16.xpose.msra.mxu0 0
      %473 = vmatpush.bf16.xpose.msra.mxu0 %v464
      %474 = vmatmul.bf16.gmra.mxu0 %v461
      %v475 = vpop.f32.mrf.mxu0
      %v476 = vadd.f32 0.0, %v475
      %v477 = vpop.f32.mrf.mxu0
      %478 = vdwg.mxu0
      %v479 = vmul.f32 %v343, 0.35355338
      %v480 = vmul.f32 %v362, 0.35355338
      %v481 = vmul.f32 %v381, 0.35355338
      %v482 = vmul.f32 %v400, 0.35355338
      %v483 = vmul.f32 %v419, 0.35355338
      %v484 = vmul.f32 %v438, 0.35355338
      %v485 = vmul.f32 %v457, 0.35355338
      %v486 = vmul.f32 %v476, 0.35355338
      %v487 = vld [vmem:[#allocation2] sm:$0xff]
      %v488 = vld [vmem:[#allocation2 + $0x8] sm:$0xff]
      %v489 = vld [vmem:[#allocation2 + $0x10] sm:$0xff]
      %v490 = vld [vmem:[#allocation2 + $0x18] sm:$0xff]
      %v491 = vld [vmem:[#allocation2 + $0x20] sm:$0xff]
      %v492 = vld [vmem:[#allocation2 + $0x28] sm:$0xff]
      %v493 = vld [vmem:[#allocation2 + $0x30] sm:$0xff]
      %v494 = vld [vmem:[#allocation2 + $0x38] sm:$0xff]
      %v495 = vsel %vm326, %v479, -inf
      %496 = vmax.xlane.f32.xlu0 %v495
      %v497 = vpop.xlane.xlu0 %496
      %v498 = vsel %vm326, %v480, -inf
      %499 = vmax.xlane.f32.xlu0 %v498
      %v500 = vpop.xlane.xlu0 %499
      %v501 = vsel %vm326, %v481, -inf
      %502 = vmax.xlane.f32.xlu0 %v501
      %v503 = vpop.xlane.xlu0 %502
      %v504 = vsel %vm326, %v482, -inf
      %505 = vmax.xlane.f32.xlu0 %v504
      %v506 = vpop.xlane.xlu0 %505
      %v507 = vsel %vm326, %v483, -inf
      %508 = vmax.xlane.f32.xlu0 %v507
      %v509 = vpop.xlane.xlu0 %508
      %v510 = vsel %vm326, %v484, -inf
      %511 = vmax.xlane.f32.xlu0 %v510
      %v512 = vpop.xlane.xlu0 %511
      %v513 = vsel %vm326, %v485, -inf
      %514 = vmax.xlane.f32.xlu0 %v513
      %v515 = vpop.xlane.xlu0 %514
      %v516 = vsel %vm326, %v486, -inf
      %517 = vmax.xlane.f32.xlu0 %v516
      %v518 = vpop.xlane.xlu0 %517
      %v519 = vmax.f32 %v487, %v497
      %v520 = vmax.f32 %v488, %v500
      %v521 = vmax.f32 %v489, %v503
      %v522 = vmax.f32 %v490, %v506
      %v523 = vmax.f32 %v491, %v509
      %v524 = vmax.f32 %v492, %v512
      %v525 = vmax.f32 %v493, %v515
      %v526 = vmax.f32 %v494, %v518
      %v527 = vsub.f32 %v487, %v519
      %v528 = vsub.f32 %v488, %v520
      %v529 = vsub.f32 %v489, %v521
      %v530 = vsub.f32 %v490, %v522
      %v531 = vsub.f32 %v491, %v523
      %v532 = vsub.f32 %v492, %v524
      %v533 = vsub.f32 %v493, %v525
      %v534 = vsub.f32 %v494, %v526
      %v535 = vmul.f32 %v527, 1.442695
      %v536 = vpow.pop %v535
      %v537 = vmul.f32 %v528, 1.442695
      %v538 = vpow.pop %v537
      %v539 = vmul.f32 %v529, 1.442695
      %v540 = vpow.pop %v539
      %v541 = vmul.f32 %v530, 1.442695
      %v542 = vpow.pop %v541
      %v543 = vmul.f32 %v531, 1.442695
      %v544 = vpow.pop %v543
      %v545 = vmul.f32 %v532, 1.442695
      %v546 = vpow.pop %v545
      %v547 = vmul.f32 %v533, 1.442695
      %v548 = vpow.pop %v547
      %v549 = vmul.f32 %v534, 1.442695
      %v550 = vpow.pop %v549
      %552 = vset.pattern.permute.xlu0 0
      %553 = vperm.xlu0 %552, %v519
      %v554 = vpop.permute.xlu0 %553
      %557 = vset.pattern.permute.xlu0 0
      %558 = vperm.xlu0 %557, %v520
      %v559 = vpop.permute.xlu0 %558
      %562 = vset.pattern.permute.xlu0 0
      %563 = vperm.xlu0 %562, %v521
      %v564 = vpop.permute.xlu0 %563
      %567 = vset.pattern.permute.xlu0 0
      %568 = vperm.xlu0 %567, %v522
      %v569 = vpop.permute.xlu0 %568
      %572 = vset.pattern.permute.xlu0 0
      %573 = vperm.xlu0 %572, %v523
      %v574 = vpop.permute.xlu0 %573
      %577 = vset.pattern.permute.xlu0 0
      %578 = vperm.xlu0 %577, %v524
      %v579 = vpop.permute.xlu0 %578
      %582 = vset.pattern.permute.xlu0 0
      %583 = vperm.xlu0 %582, %v525
      %v584 = vpop.permute.xlu0 %583
      %587 = vset.pattern.permute.xlu0 0
      %588 = vperm.xlu0 %587, %v526
      %v589 = vpop.permute.xlu0 %588
      %v591 = vsub.f32 %v479, %v554
      %v592 = vsub.f32 %v480, %v559
      %v593 = vsub.f32 %v481, %v564
      %v594 = vsub.f32 %v482, %v569
      %v595 = vsub.f32 %v483, %v574
      %v596 = vsub.f32 %v484, %v579
      %v597 = vsub.f32 %v485, %v584
      %v598 = vsub.f32 %v486, %v589
      %v599 = vmul.f32 %v591, 1.442695
      %v600 = vpow.pop %v599
      %v601 = vmul.f32 %v592, 1.442695
      %v602 = vpow.pop %v601
      %v603 = vmul.f32 %v593, 1.442695
      %v604 = vpow.pop %v603
      %v605 = vmul.f32 %v594, 1.442695
      %v606 = vpow.pop %v605
      %v607 = vmul.f32 %v595, 1.442695
      %v608 = vpow.pop %v607
      %v609 = vmul.f32 %v596, 1.442695
      %v610 = vpow.pop %v609
      %v611 = vmul.f32 %v597, 1.442695
      %v612 = vpow.pop %v611
      %v613 = vmul.f32 %v598, 1.442695
      %v614 = vpow.pop %v613
      %v615 = vld [vmem:[#allocation3] sm:$0xff]
      %v616 = vld [vmem:[#allocation3 + $0x8] sm:$0xff]
      %v617 = vld [vmem:[#allocation3 + $0x10] sm:$0xff]
      %v618 = vld [vmem:[#allocation3 + $0x18] sm:$0xff]
      %v619 = vld [vmem:[#allocation3 + $0x20] sm:$0xff]
      %v620 = vld [vmem:[#allocation3 + $0x28] sm:$0xff]
      %v621 = vld [vmem:[#allocation3 + $0x30] sm:$0xff]
      %v622 = vld [vmem:[#allocation3 + $0x38] sm:$0xff]
      %v623 = vmul.f32 %v536, %v615
      %v624 = vmul.f32 %v538, %v616
      %v625 = vmul.f32 %v540, %v617
      %v626 = vmul.f32 %v542, %v618
      %v627 = vmul.f32 %v544, %v619
      %v628 = vmul.f32 %v546, %v620
      %v629 = vmul.f32 %v548, %v621
      %v630 = vmul.f32 %v550, %v622
      %v631 = vsel %vm326, %v600, 0.0
      %632 = vadd.xlane.f32.xlu0 %v631
      %v633 = vpop.xlane.xlu0 %632
      %v634 = vsel %vm326, %v602, 0.0
      %635 = vadd.xlane.f32.xlu0 %v634
      %v636 = vpop.xlane.xlu0 %635
      %v637 = vsel %vm326, %v604, 0.0
      %638 = vadd.xlane.f32.xlu0 %v637
      %v639 = vpop.xlane.xlu0 %638
      %v640 = vsel %vm326, %v606, 0.0
      %641 = vadd.xlane.f32.xlu0 %v640
      %v642 = vpop.xlane.xlu0 %641
      %v643 = vsel %vm326, %v608, 0.0
      %644 = vadd.xlane.f32.xlu0 %v643
      %v645 = vpop.xlane.xlu0 %644
      %v646 = vsel %vm326, %v610, 0.0
      %647 = vadd.xlane.f32.xlu0 %v646
      %v648 = vpop.xlane.xlu0 %647
      %v649 = vsel %vm326, %v612, 0.0
      %650 = vadd.xlane.f32.xlu0 %v649
      %v651 = vpop.xlane.xlu0 %650
      %v652 = vsel %vm326, %v614, 0.0
      %653 = vadd.xlane.f32.xlu0 %v652
      %v654 = vpop.xlane.xlu0 %653
      %v655 = vadd.f32 %v623, %v633
      %v656 = vadd.f32 %v624, %v636
      %v657 = vadd.f32 %v625, %v639
      %v658 = vadd.f32 %v626, %v642
      %v659 = vadd.f32 %v627, %v645
      %v660 = vadd.f32 %v628, %v648
      %v661 = vadd.f32 %v629, %v651
      %v662 = vadd.f32 %v630, %v654
      %vm663 = vcmask 7168
      %664 = vst.msk [vmem:[#allocation3] sm:$0xff] %vm663, %v655
      %665 = vst.msk [vmem:[#allocation3 + $0x8] sm:$0xff] %vm663, %v656
      %666 = vst.msk [vmem:[#allocation3 + $0x10] sm:$0xff] %vm663, %v657
      %667 = vst.msk [vmem:[#allocation3 + $0x18] sm:$0xff] %vm663, %v658
      %668 = vst.msk [vmem:[#allocation3 + $0x20] sm:$0xff] %vm663, %v659
      %669 = vst.msk [vmem:[#allocation3 + $0x28] sm:$0xff] %vm663, %v660
      %670 = vst.msk [vmem:[#allocation3 + $0x30] sm:$0xff] %vm663, %v661
      %671 = vst.msk [vmem:[#allocation3 + $0x38] sm:$0xff] %vm663, %v662
      %v672 = vpack.c.bf16 %v600, %v600
      %v673 = vpack.c.bf16 %v602, %v602
      %v674 = vpack.c.bf16 %v604, %v604
      %v675 = vpack.c.bf16 %v606, %v606
      %v676 = vpack.c.bf16 %v608, %v608
      %v677 = vpack.c.bf16 %v610, %v610
      %v678 = vpack.c.bf16 %v612, %v612
      %v679 = vpack.c.bf16 %v614, %v614
      %v681 = vsel %vm326, %v672, 0
      %vm683 = vcmask 1043456
      %v685 = vsel %vm683, %v318, 0
      %687 = vmatpush.bf16.msra.mxu0 0
      %688 = vmatpush.bf16.msra.mxu0 0
      %689 = vmatpush.bf16.msra.mxu0 0
      %690 = vmatpush.bf16.msra.mxu0 0
      %691 = vmatpush.bf16.msra.mxu0 0
      %692 = vmatpush.bf16.msra.mxu0 0
      %693 = vmatpush.bf16.msra.mxu0 0
      %694 = vmatpush.bf16.msra.mxu0 %v685
      %695 = vmatmul.bf16.gmra.mxu0 %v681
      %v696 = vpop.f32.mrf.mxu0
      %v697 = vadd.f32 0.0, %v696
      %v698 = vpop.f32.mrf.mxu0
      %699 = vdwg.mxu0
      %v701 = vsel %vm326, %v673, 0
      %v704 = vsel %vm683, %v319, 0
      %706 = vmatpush.bf16.msra.mxu0 0
      %707 = vmatpush.bf16.msra.mxu0 0
      %708 = vmatpush.bf16.msra.mxu0 0
      %709 = vmatpush.bf16.msra.mxu0 0
      %710 = vmatpush.bf16.msra.mxu0 0
      %711 = vmatpush.bf16.msra.mxu0 0
      %712 = vmatpush.bf16.msra.mxu0 0
      %713 = vmatpush.bf16.msra.mxu0 %v704
      %714 = vmatmul.bf16.gmra.mxu0 %v701
      %v715 = vpop.f32.mrf.mxu0
      %v716 = vadd.f32 0.0, %v715
      %v717 = vpop.f32.mrf.mxu0
      %718 = vdwg.mxu0
      %v720 = vsel %vm326, %v674, 0
      %v723 = vsel %vm683, %v320, 0
      %725 = vmatpush.bf16.msra.mxu0 0
      %726 = vmatpush.bf16.msra.mxu0 0
      %727 = vmatpush.bf16.msra.mxu0 0
      %728 = vmatpush.bf16.msra.mxu0 0
      %729 = vmatpush.bf16.msra.mxu0 0
      %730 = vmatpush.bf16.msra.mxu0 0
      %731 = vmatpush.bf16.msra.mxu0 0
      %732 = vmatpush.bf16.msra.mxu0 %v723
      %733 = vmatmul.bf16.gmra.mxu0 %v720
      %v734 = vpop.f32.mrf.mxu0
      %v735 = vadd.f32 0.0, %v734
      %v736 = vpop.f32.mrf.mxu0
      %737 = vdwg.mxu0
      %v739 = vsel %vm326, %v675, 0
      %v742 = vsel %vm683, %v321, 0
      %744 = vmatpush.bf16.msra.mxu0 0
      %745 = vmatpush.bf16.msra.mxu0 0
      %746 = vmatpush.bf16.msra.mxu0 0
      %747 = vmatpush.bf16.msra.mxu0 0
      %748 = vmatpush.bf16.msra.mxu0 0
      %749 = vmatpush.bf16.msra.mxu0 0
      %750 = vmatpush.bf16.msra.mxu0 0
      %751 = vmatpush.bf16.msra.mxu0 %v742
      %752 = vmatmul.bf16.gmra.mxu0 %v739
      %v753 = vpop.f32.mrf.mxu0
      %v754 = vadd.f32 0.0, %v753
      %v755 = vpop.f32.mrf.mxu0
      %756 = vdwg.mxu0
      %v758 = vsel %vm326, %v676, 0
      %v761 = vsel %vm683, %v322, 0
      %763 = vmatpush.bf16.msra.mxu0 0
      %764 = vmatpush.bf16.msra.mxu0 0
      %765 = vmatpush.bf16.msra.mxu0 0
      %766 = vmatpush.bf16.msra.mxu0 0
      %767 = vmatpush.bf16.msra.mxu0 0
      %768 = vmatpush.bf16.msra.mxu0 0
      %769 = vmatpush.bf16.msra.mxu0 0
      %770 = vmatpush.bf16.msra.mxu0 %v761
      %771 = vmatmul.bf16.gmra.mxu0 %v758
      %v772 = vpop.f32.mrf.mxu0
      %v773 = vadd.f32 0.0, %v772
      %v774 = vpop.f32.mrf.mxu0
      %775 = vdwg.mxu0
      %v777 = vsel %vm326, %v677, 0
      %v780 = vsel %vm683, %v323, 0
      %782 = vmatpush.bf16.msra.mxu0 0
      %783 = vmatpush.bf16.msra.mxu0 0
      %784 = vmatpush.bf16.msra.mxu0 0
      %785 = vmatpush.bf16.msra.mxu0 0
      %786 = vmatpush.bf16.msra.mxu0 0
      %787 = vmatpush.bf16.msra.mxu0 0
      %788 = vmatpush.bf16.msra.mxu0 0
      %789 = vmatpush.bf16.msra.mxu0 %v780
      %790 = vmatmul.bf16.gmra.mxu0 %v777
      %v791 = vpop.f32.mrf.mxu0
      %v792 = vadd.f32 0.0, %v791
      %v793 = vpop.f32.mrf.mxu0
      %794 = vdwg.mxu0
      %v796 = vsel %vm326, %v678, 0
      %v799 = vsel %vm683, %v324, 0
      %801 = vmatpush.bf16.msra.mxu0 0
      %802 = vmatpush.bf16.msra.mxu0 0
      %803 = vmatpush.bf16.msra.mxu0 0
      %804 = vmatpush.bf16.msra.mxu0 0
      %805 = vmatpush.bf16.msra.mxu0 0
      %806 = vmatpush.bf16.msra.mxu0 0
      %807 = vmatpush.bf16.msra.mxu0 0
      %808 = vmatpush.bf16.msra.mxu0 %v799
      %809 = vmatmul.bf16.gmra.mxu0 %v796
      %v810 = vpop.f32.mrf.mxu0
      %v811 = vadd.f32 0.0, %v810
      %v812 = vpop.f32.mrf.mxu0
      %813 = vdwg.mxu0
      %v815 = vsel %vm326, %v679, 0
      %v818 = vsel %vm683, %v325, 0
      %820 = vmatpush.bf16.msra.mxu0 0
      %821 = vmatpush.bf16.msra.mxu0 0
      %822 = vmatpush.bf16.msra.mxu0 0
      %823 = vmatpush.bf16.msra.mxu0 0
      %824 = vmatpush.bf16.msra.mxu0 0
      %825 = vmatpush.bf16.msra.mxu0 0
      %826 = vmatpush.bf16.msra.mxu0 0
      %827 = vmatpush.bf16.msra.mxu0 %v818
      %828 = vmatmul.bf16.gmra.mxu0 %v815
      %v829 = vpop.f32.mrf.mxu0
      %v830 = vadd.f32 0.0, %v829
      %v831 = vpop.f32.mrf.mxu0
      %832 = vdwg.mxu0
      %v833 = vld [vmem:[#allocation4] sm:$0xff]
      %v834 = vld [vmem:[#allocation4 + $0x8] sm:$0xff]
      %v835 = vld [vmem:[#allocation4 + $0x10] sm:$0xff]
      %v836 = vld [vmem:[#allocation4 + $0x18] sm:$0xff]
      %v837 = vld [vmem:[#allocation4 + $0x20] sm:$0xff]
      %v838 = vld [vmem:[#allocation4 + $0x28] sm:$0xff]
      %v839 = vld [vmem:[#allocation4 + $0x30] sm:$0xff]
      %v840 = vld [vmem:[#allocation4 + $0x38] sm:$0xff]
      %842 = vset.pattern.permute.xlu0 0
      %843 = vperm.xlu0 %842, %v536
      %v844 = vpop.permute.xlu0 %843
      %847 = vset.pattern.permute.xlu0 0
      %848 = vperm.xlu0 %847, %v538
      %v849 = vpop.permute.xlu0 %848
      %852 = vset.pattern.permute.xlu0 0
      %853 = vperm.xlu0 %852, %v540
      %v854 = vpop.permute.xlu0 %853
      %857 = vset.pattern.permute.xlu0 0
      %858 = vperm.xlu0 %857, %v542
      %v859 = vpop.permute.xlu0 %858
      %862 = vset.pattern.permute.xlu0 0
      %863 = vperm.xlu0 %862, %v544
      %v864 = vpop.permute.xlu0 %863
      %867 = vset.pattern.permute.xlu0 0
      %868 = vperm.xlu0 %867, %v546
      %v869 = vpop.permute.xlu0 %868
      %872 = vset.pattern.permute.xlu0 0
      %873 = vperm.xlu0 %872, %v548
      %v874 = vpop.permute.xlu0 %873
      %877 = vset.pattern.permute.xlu0 0
      %878 = vperm.xlu0 %877, %v550
      %v879 = vpop.permute.xlu0 %878
      %v881 = vmul.f32 %v844, %v833
      %v882 = vmul.f32 %v849, %v834
      %v883 = vmul.f32 %v854, %v835
      %v884 = vmul.f32 %v859, %v836
      %v885 = vmul.f32 %v864, %v837
      %v886 = vmul.f32 %v869, %v838
      %v887 = vmul.f32 %v874, %v839
      %v888 = vmul.f32 %v879, %v840
      %v889 = vadd.f32 %v881, %v697
      %v890 = vadd.f32 %v882, %v716
      %v891 = vadd.f32 %v883, %v735
      %v892 = vadd.f32 %v884, %v754
      %v893 = vadd.f32 %v885, %v773
      %v894 = vadd.f32 %v886, %v792
      %v895 = vadd.f32 %v887, %v811
      %v896 = vadd.f32 %v888, %v830
      %897 = vst.msk [vmem:[#allocation4] sm:$0xff] %vm326, %v889
      %898 = vst.msk [vmem:[#allocation4 + $0x8] sm:$0xff] %vm326, %v890
      %899 = vst.msk [vmem:[#allocation4 + $0x10] sm:$0xff] %vm326, %v891
      %900 = vst.msk [vmem:[#allocation4 + $0x18] sm:$0xff] %vm326, %v892
      %901 = vst.msk [vmem:[#allocation4 + $0x20] sm:$0xff] %vm326, %v893
      %902 = vst.msk [vmem:[#allocation4 + $0x28] sm:$0xff] %vm326, %v894
      %903 = vst.msk [vmem:[#allocation4 + $0x30] sm:$0xff] %vm326, %v895
      %904 = vst.msk [vmem:[#allocation4 + $0x38] sm:$0xff] %vm326, %v896
      %905 = vst.msk [vmem:[#allocation2] sm:$0xff] %vm663, %v519
      %906 = vst.msk [vmem:[#allocation2 + $0x8] sm:$0xff] %vm663, %v520
      %907 = vst.msk [vmem:[#allocation2 + $0x10] sm:$0xff] %vm663, %v521
      %908 = vst.msk [vmem:[#allocation2 + $0x18] sm:$0xff] %vm663, %v522
      %909 = vst.msk [vmem:[#allocation2 + $0x20] sm:$0xff] %vm663, %v523
      %910 = vst.msk [vmem:[#allocation2 + $0x28] sm:$0xff] %vm663, %v524
      %911 = vst.msk [vmem:[#allocation2 + $0x30] sm:$0xff] %vm663, %v525
      %912 = vst.msk [vmem:[#allocation2 + $0x38] sm:$0xff] %vm663, %v526
      // Predicated region
      $region37: #{_forward.14} parent=31 // pred_check
        %p913 = pneg %p272
      $region38: #{_forward.14} parent=31 // pred_check_branch
        %915 = sbr.rel (%p913) target = $region40
      $region39: #{_forward.14} parent=31 // pred_region
        %v916 = vld [vmem:[#allocation3] sm:$0xff]
        %v917 = vld [vmem:[#allocation3 + $0x8] sm:$0xff]
        %v918 = vld [vmem:[#allocation3 + $0x10] sm:$0xff]
        %v919 = vld [vmem:[#allocation3 + $0x18] sm:$0xff]
        %v920 = vld [vmem:[#allocation3 + $0x20] sm:$0xff]
        %v921 = vld [vmem:[#allocation3 + $0x28] sm:$0xff]
        %v922 = vld [vmem:[#allocation3 + $0x30] sm:$0xff]
        %v923 = vld [vmem:[#allocation3 + $0x38] sm:$0xff]
        %v924 = vrcp.pop %v916
        %v925 = vrcp.pop %v917
        %v926 = vrcp.pop %v918
        %v927 = vrcp.pop %v919
        %v928 = vrcp.pop %v920
        %v929 = vrcp.pop %v921
        %v930 = vrcp.pop %v922
        %v931 = vrcp.pop %v923
        %v932 = vld [vmem:[#allocation4] sm:$0xff]
        %v933 = vld [vmem:[#allocation4 + $0x8] sm:$0xff]
        %v934 = vld [vmem:[#allocation4 + $0x10] sm:$0xff]
        %v935 = vld [vmem:[#allocation4 + $0x18] sm:$0xff]
        %v936 = vld [vmem:[#allocation4 + $0x20] sm:$0xff]
        %v937 = vld [vmem:[#allocation4 + $0x28] sm:$0xff]
        %v938 = vld [vmem:[#allocation4 + $0x30] sm:$0xff]
        %v939 = vld [vmem:[#allocation4 + $0x38] sm:$0xff]
        %941 = vset.pattern.permute.xlu0 0
        %942 = vperm.xlu0 %941, %v924
        %v943 = vpop.permute.xlu0 %942
        %946 = vset.pattern.permute.xlu0 0
        %947 = vperm.xlu0 %946, %v925
        %v948 = vpop.permute.xlu0 %947
        %951 = vset.pattern.permute.xlu0 0
        %952 = vperm.xlu0 %951, %v926
        %v953 = vpop.permute.xlu0 %952
        %956 = vset.pattern.permute.xlu0 0
        %957 = vperm.xlu0 %956, %v927
        %v958 = vpop.permute.xlu0 %957
        %961 = vset.pattern.permute.xlu0 0
        %962 = vperm.xlu0 %961, %v928
        %v963 = vpop.permute.xlu0 %962
        %966 = vset.pattern.permute.xlu0 0
        %967 = vperm.xlu0 %966, %v929
        %v968 = vpop.permute.xlu0 %967
        %971 = vset.pattern.permute.xlu0 0
        %972 = vperm.xlu0 %971, %v930
        %v973 = vpop.permute.xlu0 %972
        %976 = vset.pattern.permute.xlu0 0
        %977 = vperm.xlu0 %976, %v931
        %v978 = vpop.permute.xlu0 %977
        %v980 = vmul.f32 %v932, %v943
        %v981 = vmul.f32 %v933, %v948
        %v982 = vmul.f32 %v934, %v953
        %v983 = vmul.f32 %v935, %v958
        %v984 = vmul.f32 %v936, %v963
        %v985 = vmul.f32 %v937, %v968
        %v986 = vmul.f32 %v938, %v973
        %v987 = vmul.f32 %v939, %v978
        %v988 = vpack.c.bf16 %v980, %v980
        %v989 = vpack.c.bf16 %v981, %v981
        %v990 = vpack.c.bf16 %v982, %v982
        %v991 = vpack.c.bf16 %v983, %v983
        %v992 = vpack.c.bf16 %v984, %v984
        %v993 = vpack.c.bf16 %v985, %v985
        %v994 = vpack.c.bf16 %v986, %v986
        %v995 = vpack.c.bf16 %v987, %v987
        %vm996 = vcmask 60416
        %997 = vst.msk [vmem:[%s270] sm:$0xf] %vm996, %v988
        %998 = vst.msk [vmem:[%s270 + $0x4] sm:$0xf] %vm996, %v989
        %999 = vst.msk [vmem:[%s270 + $0x8] sm:$0xf] %vm996, %v990
        %1000 = vst.msk [vmem:[%s270 + $0xc] sm:$0xf] %vm996, %v991
        %1001 = vst.msk [vmem:[%s270 + $0x10] sm:$0xf] %vm996, %v992
        %1002 = vst.msk [vmem:[%s270 + $0x14] sm:$0xf] %vm996, %v993
        %1003 = vst.msk [vmem:[%s270 + $0x18] sm:$0xf] %vm996, %v994
        %1004 = vst.msk [vmem:[%s270 + $0x1c] sm:$0xf] %vm996, %v995
      $region40: #{_forward.14} parent=31 // pred_fallthru
        _
      %p1005 = scmp.lt.s32.totalorder %s19, 1
      %s1006 = scalar_select %p1005, %s19, 1
      %p1007 = scmp.lt.s32.totalorder %s20, 0
      %s1008 = scalar_select %p1007, %s20, 0
      %s1009 = smul.addr %s1006, 8
      %s1010 = sadd.s32 %s1008, %s1009
      %s1011 = smul.addr %s1010, 4
      %s1012 = scalar_lea.vmem %s3, %s1011
      // Predicated region
      $region41: #{_forward.14} parent=31 // pred_check
        %p1013 = pneg %p137
      $region42: #{_forward.14} parent=31 // pred_check_branch
        %1015 = sbr.rel (%p1013) target = $region44
      $region43: #{_forward.14} parent=31 // pred_region
        _
      $region44: #{_forward.14} parent=31 // pred_fallthru
        _
    $region32: #{_forward.14} parent=5 // pred_fallthru
      _
    %p1016 = scmp.le.s32.totalorder 2, %s9
    // Predicated region
    $region45: #{_forward.14} parent=5 // pred_check
      %p1017 = pneg %p1016
    $region46: #{_forward.14} parent=5 // pred_check_branch
      %1019 = sbr.rel (%p1017) target = $region48
    $region47: #{_forward.14} parent=5 // pred_region
      %s1020 = ssub.s32 %s9, 2
      // Predicated region
      $region49: #{_forward.14} parent=47 // pred_check
        %p1021 = pneg %p143
      $region50: #{_forward.14} parent=47 // pred_check_branch
        %1023 = sbr.rel (%p1021) target = $region52
      $region51: #{_forward.14} parent=47 // pred_region
        %p1024 = scmp.lt.s32.totalorder %s22, 1
        %s1025 = scalar_select %p1024, %s22, 1
        %p1026 = scmp.lt.s32.totalorder %s23, 0
        %s1027 = scalar_select %p1026, %s23, 0
        %s1028 = smul.addr %s1025, 8
        %s1029 = sadd.s32 %s1027, %s1028
        %s1030 = smul.addr %s1029, 4
        %s1031 = scalar_lea.vmem %s3, %s1030
      $region52: #{_forward.14} parent=47 // pred_fallthru
        _
    $region48: #{_forward.14} parent=5 // pred_fallthru
      _
  $region6: #{_forward.14} parent=0 // loop_footer
    %s13 = sadd.s32 1, %s9
  $region7: #{_forward.14} parent=0 // loop_footer_branch
    %8 = sbr.rel target = $region3
  $region8: #{_forward.14} parent=0 // loop_exit
    _

// kernel: _forward.17
$region0: #{_forward.17}
  #allocation0 [shape = 'u32[]', space=smem, size = 0x4, offset = 0x4, fixed_abs, tag = 'smem constant byte address 0x4 - core index']
  #allocation1 [shape = 'u32[72,128]{1,0:T(1,128)}', space=vmem, size = 0x9000, scoped, tag = 'internal scratch']
  %s0 = inlined_call_operand.vmem [shape: bf16[16,128], index: 0, kind: input, shape index: {}]
  %s1 = inlined_call_operand.vmem [shape: bf16[128,64], index: 1, kind: input, shape index: {}]
  %s2 = inlined_call_operand.vmem [shape: f32[1,64], index: 2, kind: input, shape index: {}]
  %s3 = inlined_call_operand.vmem [shape: bf16[16,64], index: 3, kind: input, shape index: {}]
  %s4 = inlined_call_operand.vmem [shape: bf16[16,64], index: 4, kind: output, shape index: {}]
  %s5 = sld [smem:[#allocation0]]
  $region26: #{_forward.17} parent=0
    _
  %s7 = ssub.s32 1, %s5
  %s8 = scalar_select 0, %s7, %s5
  // Predicated region
  $region2: #{_forward.17} parent=0 // pred_check
    _
  $region3: #{_forward.17} parent=0 // pred_check_branch
    %10 = sbr.rel (0) target = $region5
  $region4: #{_forward.17} parent=0 // pred_region
    _
  $region5: #{_forward.17} parent=0 // pred_fallthru
    _
  // Predicated region
  $region6: #{_forward.17} parent=0 // pred_check
    _
  $region7: #{_forward.17} parent=0 // pred_check_branch
    %12 = sbr.rel (0) target = $region9
  $region8: #{_forward.17} parent=0 // pred_region
    _
  $region9: #{_forward.17} parent=0 // pred_fallthru
    _
  // Predicated region
  $region10: #{_forward.17} parent=0 // pred_check
    _
  $region11: #{_forward.17} parent=0 // pred_check_branch
    %14 = sbr.rel (0) target = $region13
  $region12: #{_forward.17} parent=0 // pred_region
    _
  $region13: #{_forward.17} parent=0 // pred_fallthru
    _
  // Predicated region
  $region14: #{_forward.17} parent=0 // pred_check
    _
  $region15: #{_forward.17} parent=0 // pred_check_branch
    %16 = sbr.rel (0) target = $region17
  $region16: #{_forward.17} parent=0 // pred_region
    _
  $region17: #{_forward.17} parent=0 // pred_fallthru
    _
  %v17 = vld [vmem:[%s0] sm:$0xf]
  %v18 = vld [vmem:[%s0 + $0x4] sm:$0xf]
  %v19 = vld [vmem:[%s1] sm:$0xf]
  %v20 = vld [vmem:[%s1 + $0x4] sm:$0xf]
  %v21 = vld [vmem:[%s1 + $0x8] sm:$0xf]
  %v22 = vld [vmem:[%s1 + $0xc] sm:$0xf]
  %v23 = vld [vmem:[%s1 + $0x10] sm:$0xf]
  %v24 = vld [vmem:[%s1 + $0x14] sm:$0xf]
  %v25 = vld [vmem:[%s1 + $0x18] sm:$0xf]
  %v26 = vld [vmem:[%s1 + $0x1c] sm:$0xf]
  %v27 = vld [vmem:[%s1 + $0x20] sm:$0xf]
  %v28 = vld [vmem:[%s1 + $0x24] sm:$0xf]
  %v29 = vld [vmem:[%s1 + $0x28] sm:$0xf]
  %v30 = vld [vmem:[%s1 + $0x2c] sm:$0xf]
  %v31 = vld [vmem:[%s1 + $0x30] sm:$0xf]
  %v32 = vld [vmem:[%s1 + $0x34] sm:$0xf]
  %v33 = vld [vmem:[%s1 + $0x38] sm:$0xf]
  %v34 = vld [vmem:[%s1 + $0x3c] sm:$0xf]
  %v35 = vld [vmem:[%s2] sm:$0x1]
  %v37 = vperm.slane %v35, 0
  %v41 = vunpack.c.l.b16 %v17
  %v42 = vunpack.c.l.b16 %v18
  %v43 = vpack.c.b16 %v42, %v41
  %v61 = vunpack.c.l.b16 %v19
  %v62 = vunpack.c.l.b16 %v20
  %v63 = vunpack.c.l.b16 %v21
  %v64 = vunpack.c.l.b16 %v22
  %v65 = vunpack.c.l.b16 %v23
  %v66 = vunpack.c.l.b16 %v24
  %v67 = vunpack.c.l.b16 %v25
  %v68 = vunpack.c.l.b16 %v26
  %v69 = vunpack.c.l.b16 %v27
  %v70 = vunpack.c.l.b16 %v28
  %v71 = vunpack.c.l.b16 %v29
  %v72 = vunpack.c.l.b16 %v30
  %v73 = vunpack.c.l.b16 %v31
  %v74 = vunpack.c.l.b16 %v32
  %v75 = vunpack.c.l.b16 %v33
  %v76 = vunpack.c.l.b16 %v34
  %v77 = vpack.c.b16 %v62, %v61
  %v78 = vpack.c.b16 %v64, %v63
  %v79 = vpack.c.b16 %v66, %v65
  %v80 = vpack.c.b16 %v68, %v67
  %v81 = vpack.c.b16 %v70, %v69
  %v82 = vpack.c.b16 %v72, %v71
  %v83 = vpack.c.b16 %v74, %v73
  %v84 = vpack.c.b16 %v76, %v75
  %93 = vmatpush.bf16.msra.mxu0 %v84
  %94 = vmatpush.bf16.msra.mxu0 %v83
  %95 = vmatpush.bf16.msra.mxu0 %v82
  %96 = vmatpush.bf16.msra.mxu0 %v81
  %97 = vmatpush.bf16.msra.mxu0 %v80
  %98 = vmatpush.bf16.msra.mxu0 %v79
  %99 = vmatpush.bf16.msra.mxu0 %v78
  %100 = vmatpush.bf16.msra.mxu0 %v77
  %101 = vmatmul.bf16.gmra.mxu0 %v43
  %v102 = vpop.f32.mrf.mxu0
  %v103 = vadd.f32 %v37, %v102
  %v104 = vpop.f32.mrf.mxu0
  %v105 = vadd.f32 %v37, %v104
  %106 = vdwg.mxu0
  %v107 = vld [vmem:[%s3] sm:$0xf]
  %v108 = vld [vmem:[%s3 + $0x4] sm:$0xf]
  %v109 = vunpack.c.l.bf16 %v107
  %v110 = vunpack.c.l.bf16 %v108
  %v111 = vadd.f32 %v103, %v109
  %v112 = vadd.f32 %v105, %v110
  %v113 = vpack.c.bf16 %v111, %v111
  %v114 = vpack.c.bf16 %v112, %v112
  %vm115 = vcmask 519168
  %116 = vst.msk [vmem:[%s4] sm:$0xf] %vm115, %v113
  %117 = vst.msk [vmem:[%s4 + $0x4] sm:$0xf] %vm115, %v114
  // Predicated region
  $region18: #{_forward.17} parent=0 // pred_check
    _
  $region19: #{_forward.17} parent=0 // pred_check_branch
    %119 = sbr.rel (0) target = $region21
  $region20: #{_forward.17} parent=0 // pred_region
    _
  $region21: #{_forward.17} parent=0 // pred_fallthru
    _
  // Predicated region
  $region22: #{_forward.17} parent=0 // pred_check
    _
  $region23: #{_forward.17} parent=0 // pred_check_branch
    %121 = sbr.rel (0) target = $region25
  $region24: #{_forward.17} parent=0 // pred_region
    _
  $region25: #{_forward.17} parent=0 // pred_fallthru
    _

// kernel: _forward.16
$region0: #{_forward.16}
  #allocation0 [shape = 'u32[]', space=smem, size = 0x4, offset = 0x4, fixed_abs, tag = 'smem constant byte address 0x4 - core index']
  #allocation1 [shape = 'u32[72,128]{1,0:T(1,128)}', space=vmem, size = 0x9000, scoped, tag = 'internal scratch']
  %s0 = inlined_call_operand.vmem [shape: bf16[16,64], index: 0, kind: input, shape index: {}]
  %s1 = inlined_call_operand.vmem [shape: bf16[64,128], index: 1, kind: input, shape index: {}]
  %s2 = inlined_call_operand.vmem [shape: f32[1,128], index: 2, kind: input, shape index: {}]
  %s3 = inlined_call_operand.vmem [shape: bf16[16,128], index: 3, kind: output, shape index: {}]
  %s4 = sld [smem:[#allocation0]]
  $region22: #{_forward.16} parent=0
    _
  %s6 = ssub.s32 1, %s4
  %s7 = scalar_select 0, %s6, %s4
  // Predicated region
  $region2: #{_forward.16} parent=0 // pred_check
    _
  $region3: #{_forward.16} parent=0 // pred_check_branch
    %9 = sbr.rel (0) target = $region5
  $region4: #{_forward.16} parent=0 // pred_region
    _
  $region5: #{_forward.16} parent=0 // pred_fallthru
    _
  // Predicated region
  $region6: #{_forward.16} parent=0 // pred_check
    _
  $region7: #{_forward.16} parent=0 // pred_check_branch
    %11 = sbr.rel (0) target = $region9
  $region8: #{_forward.16} parent=0 // pred_region
    _
  $region9: #{_forward.16} parent=0 // pred_fallthru
    _
  // Predicated region
  $region10: #{_forward.16} parent=0 // pred_check
    _
  $region11: #{_forward.16} parent=0 // pred_check_branch
    %13 = sbr.rel (0) target = $region13
  $region12: #{_forward.16} parent=0 // pred_region
    _
  $region13: #{_forward.16} parent=0 // pred_fallthru
    _
  %v15 = vld [vmem:[%s0] sm:$0xf]
  %v16 = vld [vmem:[%s0 + $0x4] sm:$0xf]
  %v17 = vunpack.c.l.bf16 %v15
  %v18 = vunpack.c.l.bf16 %v16
  %vm19 = vcmask 523264
  %v20 = vsel %vm19, %v17, 0.0
  %21 = vadd.xlane.f32.xlu0 %v20
  %v22 = vpop.xlane.xlu0 %21
  %v23 = vsel %vm19, %v18, 0.0
  %24 = vadd.xlane.f32.xlu0 %v23
  %v25 = vpop.xlane.xlu0 %24
  %v26 = vrcp.pop 64.0
  %v27 = vmul.f32 64.0, %v26
  %v28 = vsub.f32 1.0, %v27
  %v29 = vmul.f32 %v26, %v28
  %v30 = vadd.f32 %v26, %v29
  %vm31 = vweird.f32 %v26
  %v32 = vsel %vm31, %v26, %v30
  %v33 = vmul.f32 %v22, %v32
  %v34 = vmul.f32 %v25, %v32
  %v35 = vsub.f32 %v17, %v33
  %v36 = vsub.f32 %v18, %v34
  %v37 = vmul.f32 %v35, %v35
  %v38 = vmul.f32 %v36, %v36
  %v39 = vsel %vm19, %v37, 0.0
  %40 = vadd.xlane.f32.xlu0 %v39
  %v41 = vpop.xlane.xlu0 %40
  %v42 = vsel %vm19, %v38, 0.0
  %43 = vadd.xlane.f32.xlu0 %v42
  %v44 = vpop.xlane.xlu0 %43
  %v45 = vmul.f32 %v41, %v32
  %v46 = vmul.f32 %v44, %v32
  %v47 = vadd.f32 %v45, 1e-05
  %v48 = vadd.f32 %v46, 1e-05
  %v49 = vrsqrt.pop %v47
  %v50 = vmul.f32 %v49, %v47
  %v51 = vmul.f32 %v50, %v49
  %v52 = vmul.f32 0.5, %v51
  %v53 = vsub.f32 1.5, %v52
  %v54 = vmul.f32 %v49, %v53
  %vm55 = vweird.f32 %v47
  %vm56 = vweird.f32 %v49
  %vm57 = vmor %vm55, %vm56
  %v58 = vsel %vm57, %v49, %v54
  %v59 = vrsqrt.pop %v48
  %v60 = vmul.f32 %v59, %v48
  %v61 = vmul.f32 %v60, %v59
  %v62 = vmul.f32 0.5, %v61
  %v63 = vsub.f32 1.5, %v62
  %v64 = vmul.f32 %v59, %v63
  %vm65 = vweird.f32 %v48
  %vm66 = vweird.f32 %v59
  %vm67 = vmor %vm65, %vm66
  %v68 = vsel %vm67, %v59, %v64
  %v69 = vmul.f32 %v35, %v58
  %v70 = vmul.f32 %v36, %v68
  %v71 = vpack.c.bf16 %v70, %v69
  %v72 = vld [vmem:[%s1] sm:$0xf]
  %v73 = vld [vmem:[%s1 + $0x4] sm:$0xf]
  %v74 = vld [vmem:[%s1 + $0x8] sm:$0xf]
  %v75 = vld [vmem:[%s1 + $0xc] sm:$0xf]
  %v76 = vld [vmem:[%s1 + $0x10] sm:$0xf]
  %v77 = vld [vmem:[%s1 + $0x14] sm:$0xf]
  %v78 = vld [vmem:[%s1 + $0x18] sm:$0xf]
  %v79 = vld [vmem:[%s1 + $0x1c] sm:$0xf]
  %v80 = vld [vmem:[%s2] sm:$0x1]
  %v82 = vperm.slane %v80, 0
  %v92 = vunpack.c.l.b16 %v72
  %v93 = vunpack.c.l.b16 %v73
  %v94 = vunpack.c.l.b16 %v74
  %v95 = vunpack.c.l.b16 %v75
  %v96 = vunpack.c.l.b16 %v76
  %v97 = vunpack.c.l.b16 %v77
  %v98 = vunpack.c.l.b16 %v78
  %v99 = vunpack.c.l.b16 %v79
  %v100 = vpack.c.b16 %v93, %v92
  %v101 = vpack.c.b16 %v95, %v94
  %v102 = vpack.c.b16 %v97, %v96
  %v103 = vpack.c.b16 %v99, %v98
  %v109 = vsel %vm19, %v71, 0
  %111 = vmatpush.bf16.msra.mxu0 0
  %112 = vmatpush.bf16.msra.mxu0 0
  %113 = vmatpush.bf16.msra.mxu0 0
  %114 = vmatpush.bf16.msra.mxu0 0
  %115 = vmatpush.bf16.msra.mxu0 %v103
  %116 = vmatpush.bf16.msra.mxu0 %v102
  %117 = vmatpush.bf16.msra.mxu0 %v101
  %118 = vmatpush.bf16.msra.mxu0 %v100
  %119 = vmatmul.bf16.gmra.mxu0 %v109
  %v120 = vpop.f32.mrf.mxu0
  %v121 = vadd.f32 %v82, %v120
  %v122 = vpop.f32.mrf.mxu0
  %v123 = vadd.f32 %v82, %v122
  %124 = vdwg.mxu0
  %v125 = vmul.f32 %v121, %v121
  %v126 = vmul.f32 %v123, %v123
  %v127 = vmul.f32 %v121, %v125
  %v128 = vmul.f32 %v123, %v126
  %v129 = vmul.f32 %v127, 0.044715
  %v130 = vmul.f32 %v128, 0.044715
  %v131 = vadd.f32 %v121, %v129
  %v132 = vadd.f32 %v123, %v130
  %v133 = vmul.f32 %v131, 0.7978846
  %v134 = vmul.f32 %v132, 0.7978846
  %v135 = vtanh.pop %v133
  %v136 = vtanh.pop %v134
  %v137 = vadd.f32 %v135, 1.0
  %v138 = vadd.f32 %v136, 1.0
  %v139 = vmul.f32 %v137, 0.5
  %v140 = vmul.f32 %v138, 0.5
  %v141 = vmul.f32 %v121, %v139
  %v142 = vmul.f32 %v123, %v140
  %v143 = vpack.c.bf16 %v141, %v141
  %v144 = vpack.c.bf16 %v142, %v142
  %145 = vst [vmem:[%s3] sm:$0xf] %v143
  %146 = vst [vmem:[%s3 + $0x4] sm:$0xf] %v144
  // Predicated region
  $region14: #{_forward.16} parent=0 // pred_check
    _
  $region15: #{_forward.16} parent=0 // pred_check_branch
    %148 = sbr.rel (0) target = $region17
  $region16: #{_forward.16} parent=0 // pred_region
    _
  $region17: #{_forward.16} parent=0 // pred_fallthru
    _
  // Predicated region
  $region18: #{_forward.16} parent=0 // pred_check
    _
  $region19: #{_forward.16} parent=0 // pred_check_branch
    %150 = sbr.rel (0) target = $region21
  $region20: #{_forward.16} parent=0 // pred_region
    _
  $region21: #{_forward.16} parent=0 // pred_fallthru
    _

// kernel: _forward.18
$region0: #{_forward.18}
  #allocation0 [shape = 'u32[]', space=smem, size = 0x4, offset = 0x4, fixed_abs, tag = 'smem constant byte address 0x4 - core index']
  #allocation1 [shape = 'u32[72,128]{1,0:T(1,128)}', space=vmem, size = 0x9000, scoped, tag = 'internal scratch']
  %s0 = inlined_call_operand.vmem [shape: bf16[16,64], index: 0, kind: input, shape index: {}]
  %s1 = inlined_call_operand.vmem [shape: bf16[64,192], index: 1, kind: input, shape index: {}]
  %s2 = inlined_call_operand.vmem [shape: f32[1,192], index: 2, kind: input, shape index: {}]
  %s3 = inlined_call_operand.vmem [shape: bf16[16,192], index: 3, kind: output, shape index: {}]
  %s4 = sld [smem:[#allocation0]]
  $region22: #{_forward.18} parent=0
    _
  %s6 = ssub.s32 1, %s4
  %s7 = scalar_select 0, %s6, %s4
  // Predicated region
  $region2: #{_forward.18} parent=0 // pred_check
    _
  $region3: #{_forward.18} parent=0 // pred_check_branch
    %9 = sbr.rel (0) target = $region5
  $region4: #{_forward.18} parent=0 // pred_region
    _
  $region5: #{_forward.18} parent=0 // pred_fallthru
    _
  // Predicated region
  $region6: #{_forward.18} parent=0 // pred_check
    _
  $region7: #{_forward.18} parent=0 // pred_check_branch
    %11 = sbr.rel (0) target = $region9
  $region8: #{_forward.18} parent=0 // pred_region
    _
  $region9: #{_forward.18} parent=0 // pred_fallthru
    _
  // Predicated region
  $region10: #{_forward.18} parent=0 // pred_check
    _
  $region11: #{_forward.18} parent=0 // pred_check_branch
    %13 = sbr.rel (0) target = $region13
  $region12: #{_forward.18} parent=0 // pred_region
    _
  $region13: #{_forward.18} parent=0 // pred_fallthru
    _
  %v15 = vld [vmem:[%s0] sm:$0xf]
  %v16 = vld [vmem:[%s0 + $0x4] sm:$0xf]
  %v17 = vunpack.c.l.bf16 %v15
  %v18 = vunpack.c.l.bf16 %v16
  %vm19 = vcmask 523264
  %v20 = vsel %vm19, %v17, 0.0
  %21 = vadd.xlane.f32.xlu0 %v20
  %v22 = vpop.xlane.xlu0 %21
  %v23 = vsel %vm19, %v18, 0.0
  %24 = vadd.xlane.f32.xlu0 %v23
  %v25 = vpop.xlane.xlu0 %24
  %v26 = vrcp.pop 64.0
  %v27 = vmul.f32 64.0, %v26
  %v28 = vsub.f32 1.0, %v27
  %v29 = vmul.f32 %v26, %v28
  %v30 = vadd.f32 %v26, %v29
  %vm31 = vweird.f32 %v26
  %v32 = vsel %vm31, %v26, %v30
  %v33 = vmul.f32 %v22, %v32
  %v34 = vmul.f32 %v25, %v32
  %v35 = vsub.f32 %v17, %v33
  %v36 = vsub.f32 %v18, %v34
  %v37 = vmul.f32 %v35, %v35
  %v38 = vmul.f32 %v36, %v36
  %v39 = vsel %vm19, %v37, 0.0
  %40 = vadd.xlane.f32.xlu0 %v39
  %v41 = vpop.xlane.xlu0 %40
  %v42 = vsel %vm19, %v38, 0.0
  %43 = vadd.xlane.f32.xlu0 %v42
  %v44 = vpop.xlane.xlu0 %43
  %v45 = vmul.f32 %v41, %v32
  %v46 = vmul.f32 %v44, %v32
  %v47 = vadd.f32 %v45, 1e-05
  %v48 = vadd.f32 %v46, 1e-05
  %v49 = vrsqrt.pop %v47
  %v50 = vmul.f32 %v49, %v47
  %v51 = vmul.f32 %v50, %v49
  %v52 = vmul.f32 0.5, %v51
  %v53 = vsub.f32 1.5, %v52
  %v54 = vmul.f32 %v49, %v53
  %vm55 = vweird.f32 %v47
  %vm56 = vweird.f32 %v49
  %vm57 = vmor %vm55, %vm56
  %v58 = vsel %vm57, %v49, %v54
  %v59 = vrsqrt.pop %v48
  %v60 = vmul.f32 %v59, %v48
  %v61 = vmul.f32 %v60, %v59
  %v62 = vmul.f32 0.5, %v61
  %v63 = vsub.f32 1.5, %v62
  %v64 = vmul.f32 %v59, %v63
  %vm65 = vweird.f32 %v48
  %vm66 = vweird.f32 %v59
  %vm67 = vmor %vm65, %vm66
  %v68 = vsel %vm67, %v59, %v64
  %v69 = vmul.f32 %v35, %v58
  %v70 = vmul.f32 %v36, %v68
  %v71 = vpack.c.bf16 %v70, %v69
  %v72 = vld [vmem:[%s1] sm:$0xff]
  %v73 = vld [vmem:[%s1 + $0x8] sm:$0xff]
  %v74 = vld [vmem:[%s1 + $0x10] sm:$0xff]
  %v75 = vld [vmem:[%s1 + $0x18] sm:$0xff]
  %v76 = vld [vmem:[%s1 + $0x20] sm:$0xff]
  %v77 = vld [vmem:[%s1 + $0x28] sm:$0xff]
  %v78 = vld [vmem:[%s1 + $0x30] sm:$0xff]
  %v79 = vld [vmem:[%s1 + $0x38] sm:$0xff]
  %v80 = vld [vmem:[%s2] sm:$0x3]
  %v82 = vperm.slane %v80, 0
  %v83 = vperm.slane %v80, 1
  %v94 = vunpack.c.l.b16 %v72
  %v95 = vunpack.c.h.b16 %v72
  %v96 = vunpack.c.l.b16 %v73
  %v97 = vunpack.c.h.b16 %v73
  %v98 = vunpack.c.l.b16 %v74
  %v99 = vunpack.c.h.b16 %v74
  %v100 = vunpack.c.l.b16 %v75
  %v101 = vunpack.c.h.b16 %v75
  %v102 = vunpack.c.l.b16 %v76
  %v103 = vunpack.c.h.b16 %v76
  %v104 = vunpack.c.l.b16 %v77
  %v105 = vunpack.c.h.b16 %v77
  %v106 = vunpack.c.l.b16 %v78
  %v107 = vunpack.c.h.b16 %v78
  %v108 = vunpack.c.l.b16 %v79
  %v109 = vunpack.c.h.b16 %v79
  %v110 = vpack.c.b16 %v96, %v94
  %v111 = vpack.c.b16 %v97, %v95
  %v112 = vpack.c.b16 %v100, %v98
  %v113 = vpack.c.b16 %v101, %v99
  %v114 = vpack.c.b16 %v104, %v102
  %v115 = vpack.c.b16 %v105, %v103
  %v116 = vpack.c.b16 %v108, %v106
  %v117 = vpack.c.b16 %v109, %v107
  %v127 = vsel %vm19, %v71, 0
  %129 = vmatpush.bf16.msra.mxu0 0
  %130 = vmatpush.bf16.msra.mxu0 0
  %131 = vmatpush.bf16.msra.mxu0 0
  %132 = vmatpush.bf16.msra.mxu0 0
  %133 = vmatpush.bf16.msra.mxu0 %v116
  %134 = vmatpush.bf16.msra.mxu0 %v114
  %135 = vmatpush.bf16.msra.mxu0 %v112
  %136 = vmatpush.bf16.msra.mxu0 %v110
  %137 = vmatmul.bf16.gmra.mxu0 %v127
  %v138 = vpop.f32.mrf.mxu0
  %v139 = vadd.f32 %v82, %v138
  %v140 = vpop.f32.mrf.mxu0
  %v141 = vadd.f32 %v82, %v140
  %142 = vdwg.mxu0
  %143 = vmatpush.bf16.msra.mxu0 0
  %144 = vmatpush.bf16.msra.mxu0 0
  %145 = vmatpush.bf16.msra.mxu0 0
  %146 = vmatpush.bf16.msra.mxu0 0
  %147 = vmatpush.bf16.msra.mxu0 %v117
  %148 = vmatpush.bf16.msra.mxu0 %v115
  %149 = vmatpush.bf16.msra.mxu0 %v113
  %150 = vmatpush.bf16.msra.mxu0 %v111
  %151 = vmatmul.bf16.gmra.mxu0 %v127
  %v152 = vpop.f32.mrf.mxu0
  %v153 = vadd.f32 %v83, %v152
  %v154 = vpop.f32.mrf.mxu0
  %v155 = vadd.f32 %v83, %v154
  %156 = vdwg.mxu0
  %v157 = vpack.c.bf16 %v153, %v139
  %v158 = vpack.c.bf16 %v155, %v141
  %vm159 = vcmask 1043456
  %vm160 = vcmask 523268
  %vm161 = vmor %vm160, %vm159
  %162 = vst.msk [vmem:[%s3] sm:$0xff] %vm161, %v157
  %163 = vst.msk [vmem:[%s3 + $0x8] sm:$0xff] %vm161, %v158
  // Predicated region
  $region14: #{_forward.18} parent=0 // pred_check
    _
  $region15: #{_forward.18} parent=0 // pred_check_branch
    %165 = sbr.rel (0) target = $region17
  $region16: #{_forward.18} parent=0 // pred_region
    _
  $region17: #{_forward.18} parent=0 // pred_fallthru
    _
  // Predicated region
  $region18: #{_forward.18} parent=0 // pred_check
    _
  $region19: #{_forward.18} parent=0 // pred_check_branch
    %167 = sbr.rel (0) target = $region21
  $region20: #{_forward.18} parent=0 // pred_region
    _
  $region21: #{_forward.18} parent=0 // pred_fallthru
    _

// kernel: _forward.23
$region0: #{_forward.23}
  #allocation0 [shape = 'u32[]', space=smem, size = 0x4, offset = 0x4, fixed_abs, tag = 'smem constant byte address 0x4 - core index']
  #allocation1 [shape = 'u32[72,128]{1,0:T(1,128)}', space=vmem, size = 0x9000, scoped, tag = 'internal scratch']
  %s0 = inlined_call_operand.vmem [shape: bf16[16,64], index: 0, kind: input, shape index: {}]
  %s1 = inlined_call_operand.vmem [shape: bf16[64,128], index: 1, kind: input, shape index: {}]
  %s2 = inlined_call_operand.vmem [shape: f32[1,128], index: 2, kind: input, shape index: {}]
  %s3 = inlined_call_operand.vmem [shape: f32[16,128], index: 3, kind: output, shape index: {}]
  %s4 = sld [smem:[#allocation0]]
  $region22: #{_forward.23} parent=0
    _
  %s6 = ssub.s32 1, %s4
  %s7 = scalar_select 0, %s6, %s4
  // Predicated region
  $region2: #{_forward.23} parent=0 // pred_check
    _
  $region3: #{_forward.23} parent=0 // pred_check_branch
    %9 = sbr.rel (0) target = $region5
  $region4: #{_forward.23} parent=0 // pred_region
    _
  $region5: #{_forward.23} parent=0 // pred_fallthru
    _
  // Predicated region
  $region6: #{_forward.23} parent=0 // pred_check
    _
  $region7: #{_forward.23} parent=0 // pred_check_branch
    %11 = sbr.rel (0) target = $region9
  $region8: #{_forward.23} parent=0 // pred_region
    _
  $region9: #{_forward.23} parent=0 // pred_fallthru
    _
  // Predicated region
  $region10: #{_forward.23} parent=0 // pred_check
    _
  $region11: #{_forward.23} parent=0 // pred_check_branch
    %13 = sbr.rel (0) target = $region13
  $region12: #{_forward.23} parent=0 // pred_region
    _
  $region13: #{_forward.23} parent=0 // pred_fallthru
    _
  %v15 = vld [vmem:[%s0] sm:$0xf]
  %v16 = vld [vmem:[%s0 + $0x4] sm:$0xf]
  %v17 = vld [vmem:[%s1] sm:$0xf]
  %v18 = vld [vmem:[%s1 + $0x4] sm:$0xf]
  %v19 = vld [vmem:[%s1 + $0x8] sm:$0xf]
  %v20 = vld [vmem:[%s1 + $0xc] sm:$0xf]
  %v21 = vld [vmem:[%s1 + $0x10] sm:$0xf]
  %v22 = vld [vmem:[%s1 + $0x14] sm:$0xf]
  %v23 = vld [vmem:[%s1 + $0x18] sm:$0xf]
  %v24 = vld [vmem:[%s1 + $0x1c] sm:$0xf]
  %v25 = vld [vmem:[%s2] sm:$0x1]
  %v27 = vperm.slane %v25, 0
  %v31 = vunpack.c.l.b16 %v15
  %v32 = vunpack.c.l.b16 %v16
  %v33 = vpack.c.b16 %v32, %v31
  %v42 = vunpack.c.l.b16 %v17
  %v43 = vunpack.c.l.b16 %v18
  %v44 = vunpack.c.l.b16 %v19
  %v45 = vunpack.c.l.b16 %v20
  %v46 = vunpack.c.l.b16 %v21
  %v47 = vunpack.c.l.b16 %v22
  %v48 = vunpack.c.l.b16 %v23
  %v49 = vunpack.c.l.b16 %v24
  %v50 = vpack.c.b16 %v43, %v42
  %v51 = vpack.c.b16 %v45, %v44
  %v52 = vpack.c.b16 %v47, %v46
  %v53 = vpack.c.b16 %v49, %v48
  %vm58 = vcmask 523264
  %v60 = vsel %vm58, %v33, 0
  %62 = vmatpush.bf16.msra.mxu0 0
  %63 = vmatpush.bf16.msra.mxu0 0
  %64 = vmatpush.bf16.msra.mxu0 0
  %65 = vmatpush.bf16.msra.mxu0 0
  %66 = vmatpush.bf16.msra.mxu0 %v53
  %67 = vmatpush.bf16.msra.mxu0 %v52
  %68 = vmatpush.bf16.msra.mxu0 %v51
  %69 = vmatpush.bf16.msra.mxu0 %v50
  %70 = vmatmul.bf16.gmra.mxu0 %v60
  %v71 = vpop.f32.mrf.mxu0
  %v72 = vadd.f32 %v27, %v71
  %v73 = vpop.f32.mrf.mxu0
  %v74 = vadd.f32 %v27, %v73
  %75 = vdwg.mxu0
  %76 = vst [vmem:[%s3] sm:$0xff] %v72
  %77 = vst [vmem:[%s3 + $0x8] sm:$0xff] %v74
  // Predicated region
  $region14: #{_forward.23} parent=0 // pred_check
    _
  $region15: #{_forward.23} parent=0 // pred_check_branch
    %79 = sbr.rel (0) target = $region17
  $region16: #{_forward.23} parent=0 // pred_region
    _
  $region17: #{_forward.23} parent=0 // pred_fallthru
    _
  // Predicated region
  $region18: #{_forward.23} parent=0 // pred_check
    _
  $region19: #{_forward.23} parent=0 // pred_check_branch
    %81 = sbr.rel (0) target = $region21
  $region20: #{_forward.23} parent=0 // pred_region
    _
  $region21: #{_forward.23} parent=0 // pred_fallthru
    _

</llo_original>
